<compile_context>
chip_gen: v5e
topology: v5e:2x2
jax: 0.10.0
libtpu: 0.0.40
codegen_flags: <defaults>
</compile_context>

<pallas_src>
import numpy as np

import jax
import jax.numpy as jnp
from jax import lax
from jax.experimental import pallas as pl
from jax.experimental.pallas import tpu as pltpu

H = 32            # config.SIZE_EXP_NODE_FEATURE
MAX_SEQ = 8       # max children per node + 1 (the torch.ones seed row)
MAX_INTERNAL = 16 # max internal (operator) nodes per kernel launch
MAX_NODES = 64    # max feature rows: 1 (ones) + leaves + internal nodes
NUM_OPS_PAD = 16  # 15 operator keys, padded to 16


# ----------------------------------------------------------------------------
# Pallas kernel: flattened-forest 2-layer TreeLSTM + attention-combine epilogue
# ----------------------------------------------------------------------------
def tree_lstm_forest_kernel(meta_ref, op_ref, len_ref, row_ref, child_ref,
                            feat_init_ref, wih0_ref, whh0_ref, b0_ref,
                            w1_ref, b1_ref, att_ref,
                            out_ref, feat, xbuf):
    """Process all internal nodes of up to 3 expression trees in one launch.

    SMEM tables (host-built, topologically ordered):
      meta   : [n_internal, root_row0, root_row1, root_row2, ...]
      op     : (MAX_INTERNAL,)            operator index per internal node
      len    : (MAX_INTERNAL,)            sequence length (children + 1)
      row    : (MAX_INTERNAL,)            feature row this node writes
      child  : (MAX_INTERNAL*MAX_SEQ,)    feature rows fed to the LSTM
                                          (row 0 == the all-ones seed row)
    VMEM:
      feat_init : (MAX_NODES, H)  ones row + leaf embeddings, zeros for internals
      wih0/whh0 : (NUM_OPS, H, 4H), b0 : (NUM_OPS, 1, 4H)
      w1        : (NUM_OPS, 2H, 4H) fused [Wih1; Whh1], b1 : (NUM_OPS, 1, 4H)
      att       : (1, H) attention vector

    Output (4, H): row 0 = forward_three result, rows 1..3 = root embeddings.
    """
    feat[...] = feat_init_ref[...]

    def gate_split(gates, c_prev):
        i_g = jax.nn.sigmoid(gates[:, 0 * H:1 * H])
        f_g = jax.nn.sigmoid(gates[:, 1 * H:2 * H])
        g_g = jnp.tanh(gates[:, 2 * H:3 * H])
        o_g = jax.nn.sigmoid(gates[:, 3 * H:4 * H])
        c_new = f_g * c_prev + i_g * g_g
        h_new = o_g * jnp.tanh(c_new)
        return h_new, c_new

    def node_body(n, carry):
        op = op_ref[n]
        seq_len = len_ref[n]
        out_row = row_ref[n]

        wih0 = wih0_ref[op]          # (H, 4H)
        whh0 = whh0_ref[op]          # (H, 4H)
        b0 = b0_ref[op]              # (1, 4H)
        w1 = w1_ref[op]              # (2H, 4H)  fused [Wih1; Whh1]
        b1 = b1_ref[op]              # (1, 4H)

        # Gather the (padded) child-feature sequence for this node.
        for t in range(MAX_SEQ):
            ci = child_ref[n * MAX_SEQ + t]
            xbuf[pl.ds(t, 1), :] = feat[pl.ds(ci, 1), :]

        # Hoisted layer-0 input projection: one (MAX_SEQ,H)@(H,4H) matmul,
        # off the serial per-timestep chain.
        g0_all = jnp.dot(xbuf[...], wih0,
                         preferred_element_type=jnp.float32) + b0   # (MAX_SEQ, 4H)

        h0 = jnp.zeros((1, H), jnp.float32)
        c0 = jnp.zeros((1, H), jnp.float32)
        h1 = jnp.zeros((1, H), jnp.float32)
        c1 = jnp.zeros((1, H), jnp.float32)

        # Fully unrolled timestep loop; padded steps masked by `seq_len`.
        for t in range(MAX_SEQ):
            gates0 = g0_all[t:t + 1, :] + jnp.dot(
                h0, whh0, preferred_element_type=jnp.float32)
            h0n, c0n = gate_split(gates0, c0)

            xh1 = jnp.concatenate([h0n, h1], axis=1)                 # (1, 2H)
            gates1 = jnp.dot(xh1, w1,
                             preferred_element_type=jnp.float32) + b1
            h1n, c1n = gate_split(gates1, c1)

            valid = seq_len > t
            h0 = jnp.where(valid, h0n, h0)
            c0 = jnp.where(valid, c0n, c0)
            h1 = jnp.where(valid, h1n, h1)
            c1 = jnp.where(valid, c1n, c1)

        feat[pl.ds(out_row, 1), :] = h1       # feature[-1] of this node
        return carry

    lax.fori_loop(0, meta_ref[0], node_body, 0)

    # Epilogue (forward_three): cosine-sim attention weights + softmax + mix.
    att = att_ref[...]                         # (1, H)
    att_nsq = jnp.sum(att * att)
    eps = jnp.float32(1e-8)

    r0 = feat[pl.ds(meta_ref[1], 1), :]
    r1 = feat[pl.ds(meta_ref[2], 1), :]
    r2 = feat[pl.ds(meta_ref[3], 1), :]

    def cos_sim(x):
        # torch.cosine_similarity: dot / max(||x||*||att||, eps)
        return jnp.sum(x * att) / jnp.maximum(
            jnp.sqrt(jnp.sum(x * x) * att_nsq), eps)

    s0 = cos_sim(r0)
    s1 = cos_sim(r1)
    s2 = cos_sim(r2)
    m = jnp.maximum(jnp.maximum(s0, s1), s2)
    e0 = jnp.exp(s0 - m)
    e1 = jnp.exp(s1 - m)
    e2 = jnp.exp(s2 - m)
    inv = 1.0 / (e0 + e1 + e2)

    out_ref[0:1, :] = (e0 * r0 + e1 * r1 + e2 * r2) * inv
    out_ref[1:2, :] = r0
    out_ref[2:3, :] = r1
    out_ref[3:4, :] = r2


# ----------------------------------------------------------------------------
# Wrapper (single cached compile for all tree shapes that fit the padded tables)
# ----------------------------------------------------------------------------
@jax.jit
def _forest_call(meta, node_op, node_len, node_row, child_idx, feat_init,
                 wih0_all, whh0_all, b0_all, w1_all, b1_all, attvec):
    smem = pl.BlockSpec(memory_space=pltpu.MemorySpace.SMEM)
    vmem = pl.BlockSpec(memory_space=pltpu.MemorySpace.VMEM)
    return pl.pallas_call(
        tree_lstm_forest_kernel,
        out_shape=jax.ShapeDtypeStruct((4, H), jnp.float32),
        in_specs=[smem, smem, smem, smem, smem,
                  vmem, vmem, vmem, vmem, vmem, vmem, vmem],
        out_specs=vmem,
        scratch_shapes=[pltpu.VMEM((MAX_NODES, H), jnp.float32),
                        pltpu.VMEM((MAX_SEQ, H), jnp.float32)],
    )(meta, node_op, node_len, node_row, child_idx, feat_init,
      wih0_all, whh0_all, b0_all, w1_all, b1_all, attvec)


# ----------------------------------------------------------------------------
# Deterministic parameters (mirrors nn.LSTM(H, H, 2) per operator key)
# ----------------------------------------------------------------------------
_OPS = '+,-,*,/,%,If'.split(',')
_CPS = '<,>,<=,>=,=='.split(',')
_LCS = 'Not,And,Or,Implies'.split(',')
_KEYS = _OPS + _CPS + _LCS


def _init_lstm_params(key):
    """Per-key 2-layer LSTM params, PyTorch-style uniform(-1/sqrt(H), 1/sqrt(H))."""
    bound = 1.0 / float(np.sqrt(H))
    ks = jax.random.split(key, 8)

    def u(k, shape):
        return jax.random.uniform(k, shape, jnp.float32, -bound, bound)

    # weight_ih / weight_hh are (4H, H) in PyTorch; pre-transpose to (H, 4H).
    wih0 = u(ks[0], (4 * H, H)).T
    whh0 = u(ks[1], (4 * H, H)).T
    b0 = (u(ks[2], (4 * H,)) + u(ks[3], (4 * H,))).reshape(1, 4 * H)
    wih1 = u(ks[4], (4 * H, H)).T
    whh1 = u(ks[5], (4 * H, H)).T
    b1 = (u(ks[6], (4 * H,)) + u(ks[7], (4 * H,))).reshape(1, 4 * H)
    return wih0, whh0, b0, wih1, whh1, b1


class TreeLSTMPallas:
    def __init__(self, key):
        k_rnn, k_att, k_sym = jax.random.split(key, 3)

        wih0_s, whh0_s, b0_s, w1_s, b1_s = [], [], [], [], []
        for i, opk in enumerate(_KEYS):
            wih0, whh0, b0, wih1, whh1, b1 = _init_lstm_params(
                jax.random.fold_in(k_rnn, i))
            wih0_s.append(wih0)
            whh0_s.append(whh0)
            b0_s.append(b0)
            w1_s.append(jnp.concatenate([wih1, whh1], axis=0))   # (2H, 4H)
            b1_s.append(b1)

        def _stack_pad(xs):
            a = jnp.stack(xs, axis=0)
            pad = [(0, NUM_OPS_PAD - a.shape[0])] + [(0, 0)] * (a.ndim - 1)
            return jnp.pad(a, pad)

        self.wih0_all = _stack_pad(wih0_s)   # (16, H, 4H)
        self.whh0_all = _stack_pad(whh0_s)   # (16, H, 4H)
        self.b0_all = _stack_pad(b0_s)       # (16, 1, 4H)
        self.w1_all = _stack_pad(w1_s)       # (16, 2H, 4H)
        self.b1_all = _stack_pad(b1_s)       # (16, 1, 4H)

        self.attvec = jax.random.normal(k_att, (1, H), jnp.float32)

        syms = ['x', 'y', '0', '1', '?']
        self.SymbolEmbeddings = {
            s: jax.random.normal(jax.random.fold_in(k_sym, i), (1, H), jnp.float32)
            for i, s in enumerate(syms)
        }
        self._sym_np = {s: np.asarray(v).reshape(H)
                        for s, v in self.SymbolEmbeddings.items()}
        self.op_index = {opk: i for i, opk in enumerate(_KEYS)}

    # TODO(synk): the z3 AST traversal itself (tree flattening / topological
    # ordering) has no Pallas equivalent; it stays host-side Python and only
    # produces small integer tables.  All LSTM / attention math runs on-TPU
    # in one fused kernel launch.
    def _flatten_and_run(self, exps):
        feat_rows = [np.ones(H, np.float32)]          # row 0 = torch.ones seed
        node_op, node_len, node_row, child_rows = [], [], [], []

        def rec(exp):
            if isinstance(exp, tuple):                # internal node (op, [children])
                op, children = exp
                child_ids = [rec(c) for c in children]
                assert len(child_ids) + 1 <= MAX_SEQ, "too many children"
                feat_rows.append(np.zeros(H, np.float32))
                row = len(feat_rows) - 1
                node_op.append(self.op_index[op])
                node_len.append(len(child_ids) + 1)
                node_row.append(row)
                ch = [0] + child_ids                  # 0 -> ones seed row
                child_rows.append(ch + [0] * (MAX_SEQ - len(ch)))
                return row
            sym = exp if exp in self._sym_np else '?'
            feat_rows.append(self._sym_np[sym])
            return len(feat_rows) - 1

        roots = [rec(e) for e in exps]
        while len(roots) < 3:
            roots.append(roots[-1])

        n_internal = len(node_op)
        assert n_internal <= MAX_INTERNAL, "too many operator nodes"
        assert len(feat_rows) <= MAX_NODES, "too many tree nodes"

        feat_init = np.zeros((MAX_NODES, H), np.float32)
        feat_init[:len(feat_rows)] = np.stack(feat_rows)

        def pad1(lst, n, fill=0):
            a = np.full((n,), fill, np.int32)
            a[:len(lst)] = lst
            return a

        meta = np.zeros((8,), np.int32)
        meta[0] = n_internal
        meta[1:4] = roots[:3]

        ch_a = np.zeros((MAX_INTERNAL * MAX_SEQ,), np.int32)
        if child_rows:
            ch_a[:n_internal * MAX_SEQ] = np.asarray(
                child_rows, np.int32).reshape(-1)

        return _forest_call(
            jnp.asarray(meta), jnp.asarray(pad1(node_op, MAX_INTERNAL)),
            jnp.asarray(pad1(node_len, MAX_INTERNAL, fill=1)),
            jnp.asarray(pad1(node_row, MAX_INTERNAL)),
            jnp.asarray(ch_a), jnp.asarray(feat_init),
            self.wih0_all, self.whh0_all, self.b0_all,
            self.w1_all, self.b1_all, self.attvec)

    def forward(self, exp):
        if not isinstance(exp, tuple):                # leaf symbol
            sym = exp if exp in self.SymbolEmbeddings else '?'
            return self.SymbolEmbeddings[sym]
        out = self._flatten_and_run([exp])
        return out[1:2]                               # root embedding

    def forward_three(self, args):
        pre_exp, trans_exp, post_exp = args
        out = self._flatten_and_run([pre_exp, trans_exp, post_exp])
        return out[0:1]                               # smt_emb


# ----------------------------------------------------------------------------
# Demo
# ----------------------------------------------------------------------------
if __name__ == "__main__":
    key = jax.random.PRNGKey(0)
    model = TreeLSTMPallas(key)

    # Small synthetic "z3" expressions:  pre: x < 0 ; trans: (x*y) + 1 ; post: y >= 0
    pre_exp = ('<', ['x', '0'])
    trans_exp = ('+', [('*', ['x', 'y']), '1'])
    post_exp = ('>=', ['y', '0'])

    smt_emb = model.forward_three((pre_exp, trans_exp, post_exp))
    smt_emb = jax.block_until_ready(smt_emb)
    assert smt_emb.shape == (1, H) and smt_emb.dtype == jnp.float32
    assert bool(jnp.all(jnp.isfinite(smt_emb)))

    # Differently-shaped tree reuses the same cached compile (fixed padded tables).
    root_emb = model.forward(('If', [('>', ['x', 'y']), 'x', 'y']))
    root_emb = jax.block_until_ready(root_emb)
    assert root_emb.shape == (1, H)
    assert bool(jnp.all(jnp.isfinite(root_emb)))

    print("KERNEL_OK")
</pallas_src>

<mosaic_0001>
module attributes {stable_mosaic.version = 11 : i64} {
  func.func @tree_lstm_forest_kernel(%arg0: memref<8xi32, #tpu.memory_space<smem>>, %arg1: memref<16xi32, #tpu.memory_space<smem>>, %arg2: memref<16xi32, #tpu.memory_space<smem>>, %arg3: memref<16xi32, #tpu.memory_space<smem>>, %arg4: memref<128xi32, #tpu.memory_space<smem>>, %arg5: memref<64x32xf32, #tpu.memory_space<vmem>>, %arg6: memref<16x32x128xf32, #tpu.memory_space<vmem>>, %arg7: memref<16x32x128xf32, #tpu.memory_space<vmem>>, %arg8: memref<16x1x128xf32, #tpu.memory_space<vmem>>, %arg9: memref<16x64x128xf32, #tpu.memory_space<vmem>>, %arg10: memref<16x1x128xf32, #tpu.memory_space<vmem>>, %arg11: memref<1x32xf32, #tpu.memory_space<vmem>>, %arg12: memref<4x32xf32, #tpu.memory_space<vmem>>, %arg13: memref<64x32xf32, #tpu.memory_space<vmem>>, %arg14: memref<8x32xf32, #tpu.memory_space<vmem>>) attributes {dimension_semantics = [], scalar_prefetch = 0 : i64, scratch_operands = 2 : i64, tpu.core_type = #tpu.core_type<tc>} {
    %c0 = arith.constant 0 : index
    %c0_0 = arith.constant 0 : index
    %0 = vector.load %arg5[%c0, %c0_0] : memref<64x32xf32, #tpu.memory_space<vmem>>, vector<64x32xf32>
    %c0_1 = arith.constant 0 : index
    %c0_2 = arith.constant 0 : index
    %1 = vector.load %arg13[%c0_1, %c0_2] : memref<64x32xf32, #tpu.memory_space<vmem>>, vector<64x32xf32>
    tpu.vector_store %arg13[%c0_1, %c0_2], %0 {strides = array<i32>} : memref<64x32xf32, #tpu.memory_space<vmem>>, vector<64x32xf32>,
    %c0_3 = arith.constant 0 : index
    %2 = memref.load %arg0[%c0_3] : memref<8xi32, #tpu.memory_space<smem>>
    %c0_i32 = arith.constant 0 : i32
    %c0_i32_4 = arith.constant 0 : i32
    %3 = arith.subi %2, %c0_i32_4 : i32
    %4 = arith.addi %c0_i32_4, %3 : i32
    %c1_i32 = arith.constant 1 : i32
    scf.for %arg15 = %c0_i32_4 to %4 step %c1_i32  : i32 {
      %87 = arith.index_cast %arg15 : i32 to index
      %88 = memref.load %arg1[%87] : memref<16xi32, #tpu.memory_space<smem>>
      %89 = arith.index_cast %arg15 : i32 to index
      %90 = memref.load %arg2[%89] : memref<16xi32, #tpu.memory_space<smem>>
      %91 = arith.index_cast %arg15 : i32 to index
      %92 = memref.load %arg3[%91] : memref<16xi32, #tpu.memory_space<smem>>
      %93 = arith.index_cast %88 : i32 to index
      %c0_28 = arith.constant 0 : index
      %c0_29 = arith.constant 0 : index
      %94 = vector.load %arg6[%93, %c0_28, %c0_29] : memref<16x32x128xf32, #tpu.memory_space<vmem>>, vector<1x32x128xf32>
      %95 = vector.shape_cast %94 : vector<1x32x128xf32> to vector<32x128xf32>
      %96 = arith.index_cast %88 : i32 to index
      %c0_30 = arith.constant 0 : index
      %c0_31 = arith.constant 0 : index
      %97 = vector.load %arg7[%96, %c0_30, %c0_31] : memref<16x32x128xf32, #tpu.memory_space<vmem>>, vector<1x32x128xf32>
      %98 = vector.shape_cast %97 : vector<1x32x128xf32> to vector<32x128xf32>
      %99 = arith.index_cast %88 : i32 to index
      %c0_32 = arith.constant 0 : index
      %c0_33 = arith.constant 0 : index
      %100 = vector.load %arg8[%99, %c0_32, %c0_33] : memref<16x1x128xf32, #tpu.memory_space<vmem>>, vector<1x1x128xf32>
      %101 = vector.shape_cast %100 : vector<1x1x128xf32> to vector<1x128xf32>
      %102 = arith.index_cast %88 : i32 to index
      %c0_34 = arith.constant 0 : index
      %c0_35 = arith.constant 0 : index
      %103 = vector.load %arg9[%102, %c0_34, %c0_35] : memref<16x64x128xf32, #tpu.memory_space<vmem>>, vector<1x64x128xf32>
      %104 = vector.shape_cast %103 : vector<1x64x128xf32> to vector<64x128xf32>
      %105 = arith.index_cast %88 : i32 to index
      %c0_36 = arith.constant 0 : index
      %c0_37 = arith.constant 0 : index
      %106 = vector.load %arg10[%105, %c0_36, %c0_37] : memref<16x1x128xf32, #tpu.memory_space<vmem>>, vector<1x1x128xf32>
      %107 = vector.shape_cast %106 : vector<1x1x128xf32> to vector<1x128xf32>
      %c8_i32 = arith.constant 8 : i32
      %108 = arith.muli %arg15, %c8_i32 : i32
      %c0_i32_38 = arith.constant 0 : i32
      %109 = arith.addi %108, %c0_i32_38 : i32
      %110 = arith.index_cast %109 : i32 to index
      %111 = memref.load %arg4[%110] : memref<128xi32, #tpu.memory_space<smem>>
      %112 = arith.index_cast %111 : i32 to index
      %c0_39 = arith.constant 0 : index
      %113 = vector.load %arg13[%112, %c0_39] : memref<64x32xf32, #tpu.memory_space<vmem>>, vector<1x32xf32>
      %c0_40 = arith.constant 0 : index
      %c0_41 = arith.constant 0 : index
      %114 = vector.load %arg14[%c0_40, %c0_41] : memref<8x32xf32, #tpu.memory_space<vmem>>, vector<1x32xf32>
      tpu.vector_store %arg14[%c0_40, %c0_41], %113 {strides = array<i32>} : memref<8x32xf32, #tpu.memory_space<vmem>>, vector<1x32xf32>,
      %c8_i32_42 = arith.constant 8 : i32
      %115 = arith.muli %arg15, %c8_i32_42 : i32
      %c1_i32_43 = arith.constant 1 : i32
      %116 = arith.addi %115, %c1_i32_43 : i32
      %117 = arith.index_cast %116 : i32 to index
      %118 = memref.load %arg4[%117] : memref<128xi32, #tpu.memory_space<smem>>
      %119 = arith.index_cast %118 : i32 to index
      %c0_44 = arith.constant 0 : index
      %120 = vector.load %arg13[%119, %c0_44] : memref<64x32xf32, #tpu.memory_space<vmem>>, vector<1x32xf32>
      %c1_45 = arith.constant 1 : index
      %c0_46 = arith.constant 0 : index
      %121 = vector.load %arg14[%c1_45, %c0_46] : memref<8x32xf32, #tpu.memory_space<vmem>>, vector<1x32xf32>
      tpu.vector_store %arg14[%c1_45, %c0_46], %120 {strides = array<i32>} : memref<8x32xf32, #tpu.memory_space<vmem>>, vector<1x32xf32>,
      %c8_i32_47 = arith.constant 8 : i32
      %122 = arith.muli %arg15, %c8_i32_47 : i32
      %c2_i32 = arith.constant 2 : i32
      %123 = arith.addi %122, %c2_i32 : i32
      %124 = arith.index_cast %123 : i32 to index
      %125 = memref.load %arg4[%124] : memref<128xi32, #tpu.memory_space<smem>>
      %126 = arith.index_cast %125 : i32 to index
      %c0_48 = arith.constant 0 : index
      %127 = vector.load %arg13[%126, %c0_48] : memref<64x32xf32, #tpu.memory_space<vmem>>, vector<1x32xf32>
      %c2_49 = arith.constant 2 : index
      %c0_50 = arith.constant 0 : index
      %128 = vector.load %arg14[%c2_49, %c0_50] : memref<8x32xf32, #tpu.memory_space<vmem>>, vector<1x32xf32>
      tpu.vector_store %arg14[%c2_49, %c0_50], %127 {strides = array<i32>} : memref<8x32xf32, #tpu.memory_space<vmem>>, vector<1x32xf32>,
      %c8_i32_51 = arith.constant 8 : i32
      %129 = arith.muli %arg15, %c8_i32_51 : i32
      %c3_i32 = arith.constant 3 : i32
      %130 = arith.addi %129, %c3_i32 : i32
      %131 = arith.index_cast %130 : i32 to index
      %132 = memref.load %arg4[%131] : memref<128xi32, #tpu.memory_space<smem>>
      %133 = arith.index_cast %132 : i32 to index
      %c0_52 = arith.constant 0 : index
      %134 = vector.load %arg13[%133, %c0_52] : memref<64x32xf32, #tpu.memory_space<vmem>>, vector<1x32xf32>
      %c3_53 = arith.constant 3 : index
      %c0_54 = arith.constant 0 : index
      %135 = vector.load %arg14[%c3_53, %c0_54] : memref<8x32xf32, #tpu.memory_space<vmem>>, vector<1x32xf32>
      tpu.vector_store %arg14[%c3_53, %c0_54], %134 {strides = array<i32>} : memref<8x32xf32, #tpu.memory_space<vmem>>, vector<1x32xf32>,
      %c8_i32_55 = arith.constant 8 : i32
      %136 = arith.muli %arg15, %c8_i32_55 : i32
      %c4_i32 = arith.constant 4 : i32
      %137 = arith.addi %136, %c4_i32 : i32
      %138 = arith.index_cast %137 : i32 to index
      %139 = memref.load %arg4[%138] : memref<128xi32, #tpu.memory_space<smem>>
      %140 = arith.index_cast %139 : i32 to index
      %c0_56 = arith.constant 0 : index
      %141 = vector.load %arg13[%140, %c0_56] : memref<64x32xf32, #tpu.memory_space<vmem>>, vector<1x32xf32>
      %c4 = arith.constant 4 : index
      %c0_57 = arith.constant 0 : index
      %142 = vector.load %arg14[%c4, %c0_57] : memref<8x32xf32, #tpu.memory_space<vmem>>, vector<1x32xf32>
      tpu.vector_store %arg14[%c4, %c0_57], %141 {strides = array<i32>} : memref<8x32xf32, #tpu.memory_space<vmem>>, vector<1x32xf32>,
      %c8_i32_58 = arith.constant 8 : i32
      %143 = arith.muli %arg15, %c8_i32_58 : i32
      %c5_i32 = arith.constant 5 : i32
      %144 = arith.addi %143, %c5_i32 : i32
      %145 = arith.index_cast %144 : i32 to index
      %146 = memref.load %arg4[%145] : memref<128xi32, #tpu.memory_space<smem>>
      %147 = arith.index_cast %146 : i32 to index
      %c0_59 = arith.constant 0 : index
      %148 = vector.load %arg13[%147, %c0_59] : memref<64x32xf32, #tpu.memory_space<vmem>>, vector<1x32xf32>
      %c5 = arith.constant 5 : index
      %c0_60 = arith.constant 0 : index
      %149 = vector.load %arg14[%c5, %c0_60] : memref<8x32xf32, #tpu.memory_space<vmem>>, vector<1x32xf32>
      tpu.vector_store %arg14[%c5, %c0_60], %148 {strides = array<i32>} : memref<8x32xf32, #tpu.memory_space<vmem>>, vector<1x32xf32>,
      %c8_i32_61 = arith.constant 8 : i32
      %150 = arith.muli %arg15, %c8_i32_61 : i32
      %c6_i32 = arith.constant 6 : i32
      %151 = arith.addi %150, %c6_i32 : i32
      %152 = arith.index_cast %151 : i32 to index
      %153 = memref.load %arg4[%152] : memref<128xi32, #tpu.memory_space<smem>>
      %154 = arith.index_cast %153 : i32 to index
      %c0_62 = arith.constant 0 : index
      %155 = vector.load %arg13[%154, %c0_62] : memref<64x32xf32, #tpu.memory_space<vmem>>, vector<1x32xf32>
      %c6 = arith.constant 6 : index
      %c0_63 = arith.constant 0 : index
      %156 = vector.load %arg14[%c6, %c0_63] : memref<8x32xf32, #tpu.memory_space<vmem>>, vector<1x32xf32>
      tpu.vector_store %arg14[%c6, %c0_63], %155 {strides = array<i32>} : memref<8x32xf32, #tpu.memory_space<vmem>>, vector<1x32xf32>,
      %c8_i32_64 = arith.constant 8 : i32
      %157 = arith.muli %arg15, %c8_i32_64 : i32
      %c7_i32 = arith.constant 7 : i32
      %158 = arith.addi %157, %c7_i32 : i32
      %159 = arith.index_cast %158 : i32 to index
      %160 = memref.load %arg4[%159] : memref<128xi32, #tpu.memory_space<smem>>
      %161 = arith.index_cast %160 : i32 to index
      %c0_65 = arith.constant 0 : index
      %162 = vector.load %arg13[%161, %c0_65] : memref<64x32xf32, #tpu.memory_space<vmem>>, vector<1x32xf32>
      %c7 = arith.constant 7 : index
      %c0_66 = arith.constant 0 : index
      %163 = vector.load %arg14[%c7, %c0_66] : memref<8x32xf32, #tpu.memory_space<vmem>>, vector<1x32xf32>
      tpu.vector_store %arg14[%c7, %c0_66], %162 {strides = array<i32>} : memref<8x32xf32, #tpu.memory_space<vmem>>, vector<1x32xf32>,
      %c0_67 = arith.constant 0 : index
      %c0_68 = arith.constant 0 : index
      %164 = vector.load %arg14[%c0_67, %c0_68] : memref<8x32xf32, #tpu.memory_space<vmem>>, vector<8x32xf32>
      %cst_69 = arith.constant dense<0.000000e+00> : vector<8x128xf32>
      %165 = tpu.matmul %164, %95, %cst_69 {dimension_numbers = #tpu.dot_dimension_numbers<[1], [0], [0], [1], [0, 0, 1, 1], [], []>} : vector<8x32xf32>, vector<32x128xf32>, vector<8x128xf32> -> vector<8x128xf32>
      %166 = vector.broadcast %101 : vector<1x128xf32> to vector<8x128xf32>
      %167 = arith.addf %165, %166 : vector<8x128xf32>
      %cst_70 = arith.constant 0.000000e+00 : f32
      %168 = vector.broadcast %cst_70 : f32 to vector<1x32xf32>
      %cst_71 = arith.constant 0.000000e+00 : f32
      %169 = vector.broadcast %cst_71 : f32 to vector<1x32xf32>
      %cst_72 = arith.constant 0.000000e+00 : f32
      %170 = vector.broadcast %cst_72 : f32 to vector<1x32xf32>
      %cst_73 = arith.constant 0.000000e+00 : f32
      %171 = vector.broadcast %cst_73 : f32 to vector<1x32xf32>
      %172 = vector.extract_strided_slice %167 {offsets = [0, 0], sizes = [1, 128], strides = [1, 1]} : vector<8x128xf32> to vector<1x128xf32>
      %cst_74 = arith.constant dense<0.000000e+00> : vector<1x128xf32>
      %173 = tpu.matmul %168, %98, %cst_74 {dimension_numbers = #tpu.dot_dimension_numbers<[1], [0], [0], [1], [0, 0, 1, 1], [], []>} : vector<1x32xf32>, vector<32x128xf32>, vector<1x128xf32> -> vector<1x128xf32>
      %174 = arith.addf %172, %173 : vector<1x128xf32>
      %175 = vector.extract_strided_slice %174 {offsets = [0, 0], sizes = [1, 32], strides = [1, 1]} : vector<1x128xf32> to vector<1x32xf32>
      %176 = arith.negf %175 : vector<1x32xf32>
      %177 = math.exp %176 : vector<1x32xf32>
      %cst_75 = arith.constant 1.000000e+00 : f32
      %178 = vector.broadcast %cst_75 : f32 to vector<1x32xf32>
      %179 = arith.addf %178, %177 : vector<1x32xf32>
      %180 = arith.divf %178, %179 : vector<1x32xf32>
      %181 = vector.extract_strided_slice %174 {offsets = [0, 32], sizes = [1, 32], strides = [1, 1]} : vector<1x128xf32> to vector<1x32xf32>
      %182 = arith.negf %181 : vector<1x32xf32>
      %183 = math.exp %182 : vector<1x32xf32>
      %cst_76 = arith.constant 1.000000e+00 : f32
      %184 = vector.broadcast %cst_76 : f32 to vector<1x32xf32>
      %185 = arith.addf %184, %183 : vector<1x32xf32>
      %186 = arith.divf %184, %185 : vector<1x32xf32>
      %187 = vector.extract_strided_slice %174 {offsets = [0, 64], sizes = [1, 32], strides = [1, 1]} : vector<1x128xf32> to vector<1x32xf32>
      %188 = math.tanh %187 : vector<1x32xf32>
      %189 = vector.extract_strided_slice %174 {offsets = [0, 96], sizes = [1, 32], strides = [1, 1]} : vector<1x128xf32> to vector<1x32xf32>
      %190 = arith.negf %189 : vector<1x32xf32>
      %191 = math.exp %190 : vector<1x32xf32>
      %cst_77 = arith.constant 1.000000e+00 : f32
      %192 = vector.broadcast %cst_77 : f32 to vector<1x32xf32>
      %193 = arith.addf %192, %191 : vector<1x32xf32>
      %194 = arith.divf %192, %193 : vector<1x32xf32>
      %195 = arith.mulf %186, %169 : vector<1x32xf32>
      %196 = arith.mulf %180, %188 : vector<1x32xf32>
      %197 = arith.addf %195, %196 : vector<1x32xf32>
      %198 = math.tanh %197 : vector<1x32xf32>
      %199 = arith.mulf %194, %198 : vector<1x32xf32>
      %200 = tpu.concatenate %199, %170 in 1 : vector<1x32xf32>, vector<1x32xf32> -> vector<1x64xf32>
      %cst_78 = arith.constant dense<0.000000e+00> : vector<1x128xf32>
      %201 = tpu.matmul %200, %104, %cst_78 {dimension_numbers = #tpu.dot_dimension_numbers<[1], [0], [0], [1], [0, 0, 1, 1], [], []>} : vector<1x64xf32>, vector<64x128xf32>, vector<1x128xf32> -> vector<1x128xf32>
      %202 = arith.addf %201, %107 : vector<1x128xf32>
      %203 = vector.extract_strided_slice %202 {offsets = [0, 0], sizes = [1, 32], strides = [1, 1]} : vector<1x128xf32> to vector<1x32xf32>
      %204 = arith.negf %203 : vector<1x32xf32>
      %205 = math.exp %204 : vector<1x32xf32>
      %cst_79 = arith.constant 1.000000e+00 : f32
      %206 = vector.broadcast %cst_79 : f32 to vector<1x32xf32>
      %207 = arith.addf %206, %205 : vector<1x32xf32>
      %208 = arith.divf %206, %207 : vector<1x32xf32>
      %209 = vector.extract_strided_slice %202 {offsets = [0, 32], sizes = [1, 32], strides = [1, 1]} : vector<1x128xf32> to vector<1x32xf32>
      %210 = arith.negf %209 : vector<1x32xf32>
      %211 = math.exp %210 : vector<1x32xf32>
      %cst_80 = arith.constant 1.000000e+00 : f32
      %212 = vector.broadcast %cst_80 : f32 to vector<1x32xf32>
      %213 = arith.addf %212, %211 : vector<1x32xf32>
      %214 = arith.divf %212, %213 : vector<1x32xf32>
      %215 = vector.extract_strided_slice %202 {offsets = [0, 64], sizes = [1, 32], strides = [1, 1]} : vector<1x128xf32> to vector<1x32xf32>
      %216 = math.tanh %215 : vector<1x32xf32>
      %217 = vector.extract_strided_slice %202 {offsets = [0, 96], sizes = [1, 32], strides = [1, 1]} : vector<1x128xf32> to vector<1x32xf32>
      %218 = arith.negf %217 : vector<1x32xf32>
      %219 = math.exp %218 : vector<1x32xf32>
      %cst_81 = arith.constant 1.000000e+00 : f32
      %220 = vector.broadcast %cst_81 : f32 to vector<1x32xf32>
      %221 = arith.addf %220, %219 : vector<1x32xf32>
      %222 = arith.divf %220, %221 : vector<1x32xf32>
      %223 = arith.mulf %214, %171 : vector<1x32xf32>
      %224 = arith.mulf %208, %216 : vector<1x32xf32>
      %225 = arith.addf %223, %224 : vector<1x32xf32>
      %226 = math.tanh %225 : vector<1x32xf32>
      %227 = arith.mulf %222, %226 : vector<1x32xf32>
      %c0_i32_82 = arith.constant 0 : i32
      %228 = arith.cmpi sgt, %90, %c0_i32_82 : i32
      %229 = arith.select %228, %199, %168 : vector<1x32xf32>
      %230 = arith.select %228, %197, %169 : vector<1x32xf32>
      %231 = arith.select %228, %227, %170 : vector<1x32xf32>
      %232 = arith.select %228, %225, %171 : vector<1x32xf32>
      %233 = vector.extract_strided_slice %167 {offsets = [1, 0], sizes = [1, 128], strides = [1, 1]} : vector<8x128xf32> to vector<1x128xf32>
      %cst_83 = arith.constant dense<0.000000e+00> : vector<1x128xf32>
      %234 = tpu.matmul %229, %98, %cst_83 {dimension_numbers = #tpu.dot_dimension_numbers<[1], [0], [0], [1], [0, 0, 1, 1], [], []>} : vector<1x32xf32>, vector<32x128xf32>, vector<1x128xf32> -> vector<1x128xf32>
      %235 = arith.addf %233, %234 : vector<1x128xf32>
      %236 = vector.extract_strided_slice %235 {offsets = [0, 0], sizes = [1, 32], strides = [1, 1]} : vector<1x128xf32> to vector<1x32xf32>
      %237 = arith.negf %236 : vector<1x32xf32>
      %238 = math.exp %237 : vector<1x32xf32>
      %cst_84 = arith.constant 1.000000e+00 : f32
      %239 = vector.broadcast %cst_84 : f32 to vector<1x32xf32>
      %240 = arith.addf %239, %238 : vector<1x32xf32>
      %241 = arith.divf %239, %240 : vector<1x32xf32>
      %242 = vector.extract_strided_slice %235 {offsets = [0, 32], sizes = [1, 32], strides = [1, 1]} : vector<1x128xf32> to vector<1x32xf32>
      %243 = arith.negf %242 : vector<1x32xf32>
      %244 = math.exp %243 : vector<1x32xf32>
      %cst_85 = arith.constant 1.000000e+00 : f32
      %245 = vector.broadcast %cst_85 : f32 to vector<1x32xf32>
      %246 = arith.addf %245, %244 : vector<1x32xf32>
      %247 = arith.divf %245, %246 : vector<1x32xf32>
      %248 = vector.extract_strided_slice %235 {offsets = [0, 64], sizes = [1, 32], strides = [1, 1]} : vector<1x128xf32> to vector<1x32xf32>
      %249 = math.tanh %248 : vector<1x32xf32>
      %250 = vector.extract_strided_slice %235 {offsets = [0, 96], sizes = [1, 32], strides = [1, 1]} : vector<1x128xf32> to vector<1x32xf32>
      %251 = arith.negf %250 : vector<1x32xf32>
      %252 = math.exp %251 : vector<1x32xf32>
      %cst_86 = arith.constant 1.000000e+00 : f32
      %253 = vector.broadcast %cst_86 : f32 to vector<1x32xf32>
      %254 = arith.addf %253, %252 : vector<1x32xf32>
      %255 = arith.divf %253, %254 : vector<1x32xf32>
      %256 = arith.mulf %247, %230 : vector<1x32xf32>
      %257 = arith.mulf %241, %249 : vector<1x32xf32>
      %258 = arith.addf %256, %257 : vector<1x32xf32>
      %259 = math.tanh %258 : vector<1x32xf32>
      %260 = arith.mulf %255, %259 : vector<1x32xf32>
      %261 = tpu.concatenate %260, %231 in 1 : vector<1x32xf32>, vector<1x32xf32> -> vector<1x64xf32>
      %cst_87 = arith.constant dense<0.000000e+00> : vector<1x128xf32>
      %262 = tpu.matmul %261, %104, %cst_87 {dimension_numbers = #tpu.dot_dimension_numbers<[1], [0], [0], [1], [0, 0, 1, 1], [], []>} : vector<1x64xf32>, vector<64x128xf32>, vector<1x128xf32> -> vector<1x128xf32>
      %263 = arith.addf %262, %107 : vector<1x128xf32>
      %264 = vector.extract_strided_slice %263 {offsets = [0, 0], sizes = [1, 32], strides = [1, 1]} : vector<1x128xf32> to vector<1x32xf32>
      %265 = arith.negf %264 : vector<1x32xf32>
      %266 = math.exp %265 : vector<1x32xf32>
      %cst_88 = arith.constant 1.000000e+00 : f32
      %267 = vector.broadcast %cst_88 : f32 to vector<1x32xf32>
      %268 = arith.addf %267, %266 : vector<1x32xf32>
      %269 = arith.divf %267, %268 : vector<1x32xf32>
      %270 = vector.extract_strided_slice %263 {offsets = [0, 32], sizes = [1, 32], strides = [1, 1]} : vector<1x128xf32> to vector<1x32xf32>
      %271 = arith.negf %270 : vector<1x32xf32>
      %272 = math.exp %271 : vector<1x32xf32>
      %cst_89 = arith.constant 1.000000e+00 : f32
      %273 = vector.broadcast %cst_89 : f32 to vector<1x32xf32>
      %274 = arith.addf %273, %272 : vector<1x32xf32>
      %275 = arith.divf %273, %274 : vector<1x32xf32>
      %276 = vector.extract_strided_slice %263 {offsets = [0, 64], sizes = [1, 32], strides = [1, 1]} : vector<1x128xf32> to vector<1x32xf32>
      %277 = math.tanh %276 : vector<1x32xf32>
      %278 = vector.extract_strided_slice %263 {offsets = [0, 96], sizes = [1, 32], strides = [1, 1]} : vector<1x128xf32> to vector<1x32xf32>
      %279 = arith.negf %278 : vector<1x32xf32>
      %280 = math.exp %279 : vector<1x32xf32>
      %cst_90 = arith.constant 1.000000e+00 : f32
      %281 = vector.broadcast %cst_90 : f32 to vector<1x32xf32>
      %282 = arith.addf %281, %280 : vector<1x32xf32>
      %283 = arith.divf %281, %282 : vector<1x32xf32>
      %284 = arith.mulf %275, %232 : vector<1x32xf32>
      %285 = arith.mulf %269, %277 : vector<1x32xf32>
      %286 = arith.addf %284, %285 : vector<1x32xf32>
      %287 = math.tanh %286 : vector<1x32xf32>
      %288 = arith.mulf %283, %287 : vector<1x32xf32>
      %c1_i32_91 = arith.constant 1 : i32
      %289 = arith.cmpi sgt, %90, %c1_i32_91 : i32
      %290 = arith.select %289, %260, %229 : vector<1x32xf32>
      %291 = arith.select %289, %258, %230 : vector<1x32xf32>
      %292 = arith.select %289, %288, %231 : vector<1x32xf32>
      %293 = arith.select %289, %286, %232 : vector<1x32xf32>
      %294 = vector.extract_strided_slice %167 {offsets = [2, 0], sizes = [1, 128], strides = [1, 1]} : vector<8x128xf32> to vector<1x128xf32>
      %cst_92 = arith.constant dense<0.000000e+00> : vector<1x128xf32>
      %295 = tpu.matmul %290, %98, %cst_92 {dimension_numbers = #tpu.dot_dimension_numbers<[1], [0], [0], [1], [0, 0, 1, 1], [], []>} : vector<1x32xf32>, vector<32x128xf32>, vector<1x128xf32> -> vector<1x128xf32>
      %296 = arith.addf %294, %295 : vector<1x128xf32>
      %297 = vector.extract_strided_slice %296 {offsets = [0, 0], sizes = [1, 32], strides = [1, 1]} : vector<1x128xf32> to vector<1x32xf32>
      %298 = arith.negf %297 : vector<1x32xf32>
      %299 = math.exp %298 : vector<1x32xf32>
      %cst_93 = arith.constant 1.000000e+00 : f32
      %300 = vector.broadcast %cst_93 : f32 to vector<1x32xf32>
      %301 = arith.addf %300, %299 : vector<1x32xf32>
      %302 = arith.divf %300, %301 : vector<1x32xf32>
      %303 = vector.extract_strided_slice %296 {offsets = [0, 32], sizes = [1, 32], strides = [1, 1]} : vector<1x128xf32> to vector<1x32xf32>
      %304 = arith.negf %303 : vector<1x32xf32>
      %305 = math.exp %304 : vector<1x32xf32>
      %cst_94 = arith.constant 1.000000e+00 : f32
      %306 = vector.broadcast %cst_94 : f32 to vector<1x32xf32>
      %307 = arith.addf %306, %305 : vector<1x32xf32>
      %308 = arith.divf %306, %307 : vector<1x32xf32>
      %309 = vector.extract_strided_slice %296 {offsets = [0, 64], sizes = [1, 32], strides = [1, 1]} : vector<1x128xf32> to vector<1x32xf32>
      %310 = math.tanh %309 : vector<1x32xf32>
      %311 = vector.extract_strided_slice %296 {offsets = [0, 96], sizes = [1, 32], strides = [1, 1]} : vector<1x128xf32> to vector<1x32xf32>
      %312 = arith.negf %311 : vector<1x32xf32>
      %313 = math.exp %312 : vector<1x32xf32>
      %cst_95 = arith.constant 1.000000e+00 : f32
      %314 = vector.broadcast %cst_95 : f32 to vector<1x32xf32>
      %315 = arith.addf %314, %313 : vector<1x32xf32>
      %316 = arith.divf %314, %315 : vector<1x32xf32>
      %317 = arith.mulf %308, %291 : vector<1x32xf32>
      %318 = arith.mulf %302, %310 : vector<1x32xf32>
      %319 = arith.addf %317, %318 : vector<1x32xf32>
      %320 = math.tanh %319 : vector<1x32xf32>
      %321 = arith.mulf %316, %320 : vector<1x32xf32>
      %322 = tpu.concatenate %321, %292 in 1 : vector<1x32xf32>, vector<1x32xf32> -> vector<1x64xf32>
      %cst_96 = arith.constant dense<0.000000e+00> : vector<1x128xf32>
      %323 = tpu.matmul %322, %104, %cst_96 {dimension_numbers = #tpu.dot_dimension_numbers<[1], [0], [0], [1], [0, 0, 1, 1], [], []>} : vector<1x64xf32>, vector<64x128xf32>, vector<1x128xf32> -> vector<1x128xf32>
      %324 = arith.addf %323, %107 : vector<1x128xf32>
      %325 = vector.extract_strided_slice %324 {offsets = [0, 0], sizes = [1, 32], strides = [1, 1]} : vector<1x128xf32> to vector<1x32xf32>
      %326 = arith.negf %325 : vector<1x32xf32>
      %327 = math.exp %326 : vector<1x32xf32>
      %cst_97 = arith.constant 1.000000e+00 : f32
      %328 = vector.broadcast %cst_97 : f32 to vector<1x32xf32>
      %329 = arith.addf %328, %327 : vector<1x32xf32>
      %330 = arith.divf %328, %329 : vector<1x32xf32>
      %331 = vector.extract_strided_slice %324 {offsets = [0, 32], sizes = [1, 32], strides = [1, 1]} : vector<1x128xf32> to vector<1x32xf32>
      %332 = arith.negf %331 : vector<1x32xf32>
      %333 = math.exp %332 : vector<1x32xf32>
      %cst_98 = arith.constant 1.000000e+00 : f32
      %334 = vector.broadcast %cst_98 : f32 to vector<1x32xf32>
      %335 = arith.addf %334, %333 : vector<1x32xf32>
      %336 = arith.divf %334, %335 : vector<1x32xf32>
      %337 = vector.extract_strided_slice %324 {offsets = [0, 64], sizes = [1, 32], strides = [1, 1]} : vector<1x128xf32> to vector<1x32xf32>
      %338 = math.tanh %337 : vector<1x32xf32>
      %339 = vector.extract_strided_slice %324 {offsets = [0, 96], sizes = [1, 32], strides = [1, 1]} : vector<1x128xf32> to vector<1x32xf32>
      %340 = arith.negf %339 : vector<1x32xf32>
      %341 = math.exp %340 : vector<1x32xf32>
      %cst_99 = arith.constant 1.000000e+00 : f32
      %342 = vector.broadcast %cst_99 : f32 to vector<1x32xf32>
      %343 = arith.addf %342, %341 : vector<1x32xf32>
      %344 = arith.divf %342, %343 : vector<1x32xf32>
      %345 = arith.mulf %336, %293 : vector<1x32xf32>
      %346 = arith.mulf %330, %338 : vector<1x32xf32>
      %347 = arith.addf %345, %346 : vector<1x32xf32>
      %348 = math.tanh %347 : vector<1x32xf32>
      %349 = arith.mulf %344, %348 : vector<1x32xf32>
      %c2_i32_100 = arith.constant 2 : i32
      %350 = arith.cmpi sgt, %90, %c2_i32_100 : i32
      %351 = arith.select %350, %321, %290 : vector<1x32xf32>
      %352 = arith.select %350, %319, %291 : vector<1x32xf32>
      %353 = arith.select %350, %349, %292 : vector<1x32xf32>
      %354 = arith.select %350, %347, %293 : vector<1x32xf32>
      %355 = vector.extract_strided_slice %167 {offsets = [3, 0], sizes = [1, 128], strides = [1, 1]} : vector<8x128xf32> to vector<1x128xf32>
      %cst_101 = arith.constant dense<0.000000e+00> : vector<1x128xf32>
      %356 = tpu.matmul %351, %98, %cst_101 {dimension_numbers = #tpu.dot_dimension_numbers<[1], [0], [0], [1], [0, 0, 1, 1], [], []>} : vector<1x32xf32>, vector<32x128xf32>, vector<1x128xf32> -> vector<1x128xf32>
      %357 = arith.addf %355, %356 : vector<1x128xf32>
      %358 = vector.extract_strided_slice %357 {offsets = [0, 0], sizes = [1, 32], strides = [1, 1]} : vector<1x128xf32> to vector<1x32xf32>
      %359 = arith.negf %358 : vector<1x32xf32>
      %360 = math.exp %359 : vector<1x32xf32>
      %cst_102 = arith.constant 1.000000e+00 : f32
      %361 = vector.broadcast %cst_102 : f32 to vector<1x32xf32>
      %362 = arith.addf %361, %360 : vector<1x32xf32>
      %363 = arith.divf %361, %362 : vector<1x32xf32>
      %364 = vector.extract_strided_slice %357 {offsets = [0, 32], sizes = [1, 32], strides = [1, 1]} : vector<1x128xf32> to vector<1x32xf32>
      %365 = arith.negf %364 : vector<1x32xf32>
      %366 = math.exp %365 : vector<1x32xf32>
      %cst_103 = arith.constant 1.000000e+00 : f32
      %367 = vector.broadcast %cst_103 : f32 to vector<1x32xf32>
      %368 = arith.addf %367, %366 : vector<1x32xf32>
      %369 = arith.divf %367, %368 : vector<1x32xf32>
      %370 = vector.extract_strided_slice %357 {offsets = [0, 64], sizes = [1, 32], strides = [1, 1]} : vector<1x128xf32> to vector<1x32xf32>
      %371 = math.tanh %370 : vector<1x32xf32>
      %372 = vector.extract_strided_slice %357 {offsets = [0, 96], sizes = [1, 32], strides = [1, 1]} : vector<1x128xf32> to vector<1x32xf32>
      %373 = arith.negf %372 : vector<1x32xf32>
      %374 = math.exp %373 : vector<1x32xf32>
      %cst_104 = arith.constant 1.000000e+00 : f32
      %375 = vector.broadcast %cst_104 : f32 to vector<1x32xf32>
      %376 = arith.addf %375, %374 : vector<1x32xf32>
      %377 = arith.divf %375, %376 : vector<1x32xf32>
      %378 = arith.mulf %369, %352 : vector<1x32xf32>
      %379 = arith.mulf %363, %371 : vector<1x32xf32>
      %380 = arith.addf %378, %379 : vector<1x32xf32>
      %381 = math.tanh %380 : vector<1x32xf32>
      %382 = arith.mulf %377, %381 : vector<1x32xf32>
      %383 = tpu.concatenate %382, %353 in 1 : vector<1x32xf32>, vector<1x32xf32> -> vector<1x64xf32>
      %cst_105 = arith.constant dense<0.000000e+00> : vector<1x128xf32>
      %384 = tpu.matmul %383, %104, %cst_105 {dimension_numbers = #tpu.dot_dimension_numbers<[1], [0], [0], [1], [0, 0, 1, 1], [], []>} : vector<1x64xf32>, vector<64x128xf32>, vector<1x128xf32> -> vector<1x128xf32>
      %385 = arith.addf %384, %107 : vector<1x128xf32>
      %386 = vector.extract_strided_slice %385 {offsets = [0, 0], sizes = [1, 32], strides = [1, 1]} : vector<1x128xf32> to vector<1x32xf32>
      %387 = arith.negf %386 : vector<1x32xf32>
      %388 = math.exp %387 : vector<1x32xf32>
      %cst_106 = arith.constant 1.000000e+00 : f32
      %389 = vector.broadcast %cst_106 : f32 to vector<1x32xf32>
      %390 = arith.addf %389, %388 : vector<1x32xf32>
      %391 = arith.divf %389, %390 : vector<1x32xf32>
      %392 = vector.extract_strided_slice %385 {offsets = [0, 32], sizes = [1, 32], strides = [1, 1]} : vector<1x128xf32> to vector<1x32xf32>
      %393 = arith.negf %392 : vector<1x32xf32>
      %394 = math.exp %393 : vector<1x32xf32>
      %cst_107 = arith.constant 1.000000e+00 : f32
      %395 = vector.broadcast %cst_107 : f32 to vector<1x32xf32>
      %396 = arith.addf %395, %394 : vector<1x32xf32>
      %397 = arith.divf %395, %396 : vector<1x32xf32>
      %398 = vector.extract_strided_slice %385 {offsets = [0, 64], sizes = [1, 32], strides = [1, 1]} : vector<1x128xf32> to vector<1x32xf32>
      %399 = math.tanh %398 : vector<1x32xf32>
      %400 = vector.extract_strided_slice %385 {offsets = [0, 96], sizes = [1, 32], strides = [1, 1]} : vector<1x128xf32> to vector<1x32xf32>
      %401 = arith.negf %400 : vector<1x32xf32>
      %402 = math.exp %401 : vector<1x32xf32>
      %cst_108 = arith.constant 1.000000e+00 : f32
      %403 = vector.broadcast %cst_108 : f32 to vector<1x32xf32>
      %404 = arith.addf %403, %402 : vector<1x32xf32>
      %405 = arith.divf %403, %404 : vector<1x32xf32>
      %406 = arith.mulf %397, %354 : vector<1x32xf32>
      %407 = arith.mulf %391, %399 : vector<1x32xf32>
      %408 = arith.addf %406, %407 : vector<1x32xf32>
      %409 = math.tanh %408 : vector<1x32xf32>
      %410 = arith.mulf %405, %409 : vector<1x32xf32>
      %c3_i32_109 = arith.constant 3 : i32
      %411 = arith.cmpi sgt, %90, %c3_i32_109 : i32
      %412 = arith.select %411, %382, %351 : vector<1x32xf32>
      %413 = arith.select %411, %380, %352 : vector<1x32xf32>
      %414 = arith.select %411, %410, %353 : vector<1x32xf32>
      %415 = arith.select %411, %408, %354 : vector<1x32xf32>
      %416 = vector.extract_strided_slice %167 {offsets = [4, 0], sizes = [1, 128], strides = [1, 1]} : vector<8x128xf32> to vector<1x128xf32>
      %cst_110 = arith.constant dense<0.000000e+00> : vector<1x128xf32>
      %417 = tpu.matmul %412, %98, %cst_110 {dimension_numbers = #tpu.dot_dimension_numbers<[1], [0], [0], [1], [0, 0, 1, 1], [], []>} : vector<1x32xf32>, vector<32x128xf32>, vector<1x128xf32> -> vector<1x128xf32>
      %418 = arith.addf %416, %417 : vector<1x128xf32>
      %419 = vector.extract_strided_slice %418 {offsets = [0, 0], sizes = [1, 32], strides = [1, 1]} : vector<1x128xf32> to vector<1x32xf32>
      %420 = arith.negf %419 : vector<1x32xf32>
      %421 = math.exp %420 : vector<1x32xf32>
      %cst_111 = arith.constant 1.000000e+00 : f32
      %422 = vector.broadcast %cst_111 : f32 to vector<1x32xf32>
      %423 = arith.addf %422, %421 : vector<1x32xf32>
      %424 = arith.divf %422, %423 : vector<1x32xf32>
      %425 = vector.extract_strided_slice %418 {offsets = [0, 32], sizes = [1, 32], strides = [1, 1]} : vector<1x128xf32> to vector<1x32xf32>
      %426 = arith.negf %425 : vector<1x32xf32>
      %427 = math.exp %426 : vector<1x32xf32>
      %cst_112 = arith.constant 1.000000e+00 : f32
      %428 = vector.broadcast %cst_112 : f32 to vector<1x32xf32>
      %429 = arith.addf %428, %427 : vector<1x32xf32>
      %430 = arith.divf %428, %429 : vector<1x32xf32>
      %431 = vector.extract_strided_slice %418 {offsets = [0, 64], sizes = [1, 32], strides = [1, 1]} : vector<1x128xf32> to vector<1x32xf32>
      %432 = math.tanh %431 : vector<1x32xf32>
      %433 = vector.extract_strided_slice %418 {offsets = [0, 96], sizes = [1, 32], strides = [1, 1]} : vector<1x128xf32> to vector<1x32xf32>
      %434 = arith.negf %433 : vector<1x32xf32>
      %435 = math.exp %434 : vector<1x32xf32>
      %cst_113 = arith.constant 1.000000e+00 : f32
      %436 = vector.broadcast %cst_113 : f32 to vector<1x32xf32>
      %437 = arith.addf %436, %435 : vector<1x32xf32>
      %438 = arith.divf %436, %437 : vector<1x32xf32>
      %439 = arith.mulf %430, %413 : vector<1x32xf32>
      %440 = arith.mulf %424, %432 : vector<1x32xf32>
      %441 = arith.addf %439, %440 : vector<1x32xf32>
      %442 = math.tanh %441 : vector<1x32xf32>
      %443 = arith.mulf %438, %442 : vector<1x32xf32>
      %444 = tpu.concatenate %443, %414 in 1 : vector<1x32xf32>, vector<1x32xf32> -> vector<1x64xf32>
      %cst_114 = arith.constant dense<0.000000e+00> : vector<1x128xf32>
      %445 = tpu.matmul %444, %104, %cst_114 {dimension_numbers = #tpu.dot_dimension_numbers<[1], [0], [0], [1], [0, 0, 1, 1], [], []>} : vector<1x64xf32>, vector<64x128xf32>, vector<1x128xf32> -> vector<1x128xf32>
      %446 = arith.addf %445, %107 : vector<1x128xf32>
      %447 = vector.extract_strided_slice %446 {offsets = [0, 0], sizes = [1, 32], strides = [1, 1]} : vector<1x128xf32> to vector<1x32xf32>
      %448 = arith.negf %447 : vector<1x32xf32>
      %449 = math.exp %448 : vector<1x32xf32>
      %cst_115 = arith.constant 1.000000e+00 : f32
      %450 = vector.broadcast %cst_115 : f32 to vector<1x32xf32>
      %451 = arith.addf %450, %449 : vector<1x32xf32>
      %452 = arith.divf %450, %451 : vector<1x32xf32>
      %453 = vector.extract_strided_slice %446 {offsets = [0, 32], sizes = [1, 32], strides = [1, 1]} : vector<1x128xf32> to vector<1x32xf32>
      %454 = arith.negf %453 : vector<1x32xf32>
      %455 = math.exp %454 : vector<1x32xf32>
      %cst_116 = arith.constant 1.000000e+00 : f32
      %456 = vector.broadcast %cst_116 : f32 to vector<1x32xf32>
      %457 = arith.addf %456, %455 : vector<1x32xf32>
      %458 = arith.divf %456, %457 : vector<1x32xf32>
      %459 = vector.extract_strided_slice %446 {offsets = [0, 64], sizes = [1, 32], strides = [1, 1]} : vector<1x128xf32> to vector<1x32xf32>
      %460 = math.tanh %459 : vector<1x32xf32>
      %461 = vector.extract_strided_slice %446 {offsets = [0, 96], sizes = [1, 32], strides = [1, 1]} : vector<1x128xf32> to vector<1x32xf32>
      %462 = arith.negf %461 : vector<1x32xf32>
      %463 = math.exp %462 : vector<1x32xf32>
      %cst_117 = arith.constant 1.000000e+00 : f32
      %464 = vector.broadcast %cst_117 : f32 to vector<1x32xf32>
      %465 = arith.addf %464, %463 : vector<1x32xf32>
      %466 = arith.divf %464, %465 : vector<1x32xf32>
      %467 = arith.mulf %458, %415 : vector<1x32xf32>
      %468 = arith.mulf %452, %460 : vector<1x32xf32>
      %469 = arith.addf %467, %468 : vector<1x32xf32>
      %470 = math.tanh %469 : vector<1x32xf32>
      %471 = arith.mulf %466, %470 : vector<1x32xf32>
      %c4_i32_118 = arith.constant 4 : i32
      %472 = arith.cmpi sgt, %90, %c4_i32_118 : i32
      %473 = arith.select %472, %443, %412 : vector<1x32xf32>
      %474 = arith.select %472, %441, %413 : vector<1x32xf32>
      %475 = arith.select %472, %471, %414 : vector<1x32xf32>
      %476 = arith.select %472, %469, %415 : vector<1x32xf32>
      %477 = vector.extract_strided_slice %167 {offsets = [5, 0], sizes = [1, 128], strides = [1, 1]} : vector<8x128xf32> to vector<1x128xf32>
      %cst_119 = arith.constant dense<0.000000e+00> : vector<1x128xf32>
      %478 = tpu.matmul %473, %98, %cst_119 {dimension_numbers = #tpu.dot_dimension_numbers<[1], [0], [0], [1], [0, 0, 1, 1], [], []>} : vector<1x32xf32>, vector<32x128xf32>, vector<1x128xf32> -> vector<1x128xf32>
      %479 = arith.addf %477, %478 : vector<1x128xf32>
      %480 = vector.extract_strided_slice %479 {offsets = [0, 0], sizes = [1, 32], strides = [1, 1]} : vector<1x128xf32> to vector<1x32xf32>
      %481 = arith.negf %480 : vector<1x32xf32>
      %482 = math.exp %481 : vector<1x32xf32>
      %cst_120 = arith.constant 1.000000e+00 : f32
      %483 = vector.broadcast %cst_120 : f32 to vector<1x32xf32>
      %484 = arith.addf %483, %482 : vector<1x32xf32>
      %485 = arith.divf %483, %484 : vector<1x32xf32>
      %486 = vector.extract_strided_slice %479 {offsets = [0, 32], sizes = [1, 32], strides = [1, 1]} : vector<1x128xf32> to vector<1x32xf32>
      %487 = arith.negf %486 : vector<1x32xf32>
      %488 = math.exp %487 : vector<1x32xf32>
      %cst_121 = arith.constant 1.000000e+00 : f32
      %489 = vector.broadcast %cst_121 : f32 to vector<1x32xf32>
      %490 = arith.addf %489, %488 : vector<1x32xf32>
      %491 = arith.divf %489, %490 : vector<1x32xf32>
      %492 = vector.extract_strided_slice %479 {offsets = [0, 64], sizes = [1, 32], strides = [1, 1]} : vector<1x128xf32> to vector<1x32xf32>
      %493 = math.tanh %492 : vector<1x32xf32>
      %494 = vector.extract_strided_slice %479 {offsets = [0, 96], sizes = [1, 32], strides = [1, 1]} : vector<1x128xf32> to vector<1x32xf32>
      %495 = arith.negf %494 : vector<1x32xf32>
      %496 = math.exp %495 : vector<1x32xf32>
      %cst_122 = arith.constant 1.000000e+00 : f32
      %497 = vector.broadcast %cst_122 : f32 to vector<1x32xf32>
      %498 = arith.addf %497, %496 : vector<1x32xf32>
      %499 = arith.divf %497, %498 : vector<1x32xf32>
      %500 = arith.mulf %491, %474 : vector<1x32xf32>
      %501 = arith.mulf %485, %493 : vector<1x32xf32>
      %502 = arith.addf %500, %501 : vector<1x32xf32>
      %503 = math.tanh %502 : vector<1x32xf32>
      %504 = arith.mulf %499, %503 : vector<1x32xf32>
      %505 = tpu.concatenate %504, %475 in 1 : vector<1x32xf32>, vector<1x32xf32> -> vector<1x64xf32>
      %cst_123 = arith.constant dense<0.000000e+00> : vector<1x128xf32>
      %506 = tpu.matmul %505, %104, %cst_123 {dimension_numbers = #tpu.dot_dimension_numbers<[1], [0], [0], [1], [0, 0, 1, 1], [], []>} : vector<1x64xf32>, vector<64x128xf32>, vector<1x128xf32> -> vector<1x128xf32>
      %507 = arith.addf %506, %107 : vector<1x128xf32>
      %508 = vector.extract_strided_slice %507 {offsets = [0, 0], sizes = [1, 32], strides = [1, 1]} : vector<1x128xf32> to vector<1x32xf32>
      %509 = arith.negf %508 : vector<1x32xf32>
      %510 = math.exp %509 : vector<1x32xf32>
      %cst_124 = arith.constant 1.000000e+00 : f32
      %511 = vector.broadcast %cst_124 : f32 to vector<1x32xf32>
      %512 = arith.addf %511, %510 : vector<1x32xf32>
      %513 = arith.divf %511, %512 : vector<1x32xf32>
      %514 = vector.extract_strided_slice %507 {offsets = [0, 32], sizes = [1, 32], strides = [1, 1]} : vector<1x128xf32> to vector<1x32xf32>
      %515 = arith.negf %514 : vector<1x32xf32>
      %516 = math.exp %515 : vector<1x32xf32>
      %cst_125 = arith.constant 1.000000e+00 : f32
      %517 = vector.broadcast %cst_125 : f32 to vector<1x32xf32>
      %518 = arith.addf %517, %516 : vector<1x32xf32>
      %519 = arith.divf %517, %518 : vector<1x32xf32>
      %520 = vector.extract_strided_slice %507 {offsets = [0, 64], sizes = [1, 32], strides = [1, 1]} : vector<1x128xf32> to vector<1x32xf32>
      %521 = math.tanh %520 : vector<1x32xf32>
      %522 = vector.extract_strided_slice %507 {offsets = [0, 96], sizes = [1, 32], strides = [1, 1]} : vector<1x128xf32> to vector<1x32xf32>
      %523 = arith.negf %522 : vector<1x32xf32>
      %524 = math.exp %523 : vector<1x32xf32>
      %cst_126 = arith.constant 1.000000e+00 : f32
      %525 = vector.broadcast %cst_126 : f32 to vector<1x32xf32>
      %526 = arith.addf %525, %524 : vector<1x32xf32>
      %527 = arith.divf %525, %526 : vector<1x32xf32>
      %528 = arith.mulf %519, %476 : vector<1x32xf32>
      %529 = arith.mulf %513, %521 : vector<1x32xf32>
      %530 = arith.addf %528, %529 : vector<1x32xf32>
      %531 = math.tanh %530 : vector<1x32xf32>
      %532 = arith.mulf %527, %531 : vector<1x32xf32>
      %c5_i32_127 = arith.constant 5 : i32
      %533 = arith.cmpi sgt, %90, %c5_i32_127 : i32
      %534 = arith.select %533, %504, %473 : vector<1x32xf32>
      %535 = arith.select %533, %502, %474 : vector<1x32xf32>
      %536 = arith.select %533, %532, %475 : vector<1x32xf32>
      %537 = arith.select %533, %530, %476 : vector<1x32xf32>
      %538 = vector.extract_strided_slice %167 {offsets = [6, 0], sizes = [1, 128], strides = [1, 1]} : vector<8x128xf32> to vector<1x128xf32>
      %cst_128 = arith.constant dense<0.000000e+00> : vector<1x128xf32>
      %539 = tpu.matmul %534, %98, %cst_128 {dimension_numbers = #tpu.dot_dimension_numbers<[1], [0], [0], [1], [0, 0, 1, 1], [], []>} : vector<1x32xf32>, vector<32x128xf32>, vector<1x128xf32> -> vector<1x128xf32>
      %540 = arith.addf %538, %539 : vector<1x128xf32>
      %541 = vector.extract_strided_slice %540 {offsets = [0, 0], sizes = [1, 32], strides = [1, 1]} : vector<1x128xf32> to vector<1x32xf32>
      %542 = arith.negf %541 : vector<1x32xf32>
      %543 = math.exp %542 : vector<1x32xf32>
      %cst_129 = arith.constant 1.000000e+00 : f32
      %544 = vector.broadcast %cst_129 : f32 to vector<1x32xf32>
      %545 = arith.addf %544, %543 : vector<1x32xf32>
      %546 = arith.divf %544, %545 : vector<1x32xf32>
      %547 = vector.extract_strided_slice %540 {offsets = [0, 32], sizes = [1, 32], strides = [1, 1]} : vector<1x128xf32> to vector<1x32xf32>
      %548 = arith.negf %547 : vector<1x32xf32>
      %549 = math.exp %548 : vector<1x32xf32>
      %cst_130 = arith.constant 1.000000e+00 : f32
      %550 = vector.broadcast %cst_130 : f32 to vector<1x32xf32>
      %551 = arith.addf %550, %549 : vector<1x32xf32>
      %552 = arith.divf %550, %551 : vector<1x32xf32>
      %553 = vector.extract_strided_slice %540 {offsets = [0, 64], sizes = [1, 32], strides = [1, 1]} : vector<1x128xf32> to vector<1x32xf32>
      %554 = math.tanh %553 : vector<1x32xf32>
      %555 = vector.extract_strided_slice %540 {offsets = [0, 96], sizes = [1, 32], strides = [1, 1]} : vector<1x128xf32> to vector<1x32xf32>
      %556 = arith.negf %555 : vector<1x32xf32>
      %557 = math.exp %556 : vector<1x32xf32>
      %cst_131 = arith.constant 1.000000e+00 : f32
      %558 = vector.broadcast %cst_131 : f32 to vector<1x32xf32>
      %559 = arith.addf %558, %557 : vector<1x32xf32>
      %560 = arith.divf %558, %559 : vector<1x32xf32>
      %561 = arith.mulf %552, %535 : vector<1x32xf32>
      %562 = arith.mulf %546, %554 : vector<1x32xf32>
      %563 = arith.addf %561, %562 : vector<1x32xf32>
      %564 = math.tanh %563 : vector<1x32xf32>
      %565 = arith.mulf %560, %564 : vector<1x32xf32>
      %566 = tpu.concatenate %565, %536 in 1 : vector<1x32xf32>, vector<1x32xf32> -> vector<1x64xf32>
      %cst_132 = arith.constant dense<0.000000e+00> : vector<1x128xf32>
      %567 = tpu.matmul %566, %104, %cst_132 {dimension_numbers = #tpu.dot_dimension_numbers<[1], [0], [0], [1], [0, 0, 1, 1], [], []>} : vector<1x64xf32>, vector<64x128xf32>, vector<1x128xf32> -> vector<1x128xf32>
      %568 = arith.addf %567, %107 : vector<1x128xf32>
      %569 = vector.extract_strided_slice %568 {offsets = [0, 0], sizes = [1, 32], strides = [1, 1]} : vector<1x128xf32> to vector<1x32xf32>
      %570 = arith.negf %569 : vector<1x32xf32>
      %571 = math.exp %570 : vector<1x32xf32>
      %cst_133 = arith.constant 1.000000e+00 : f32
      %572 = vector.broadcast %cst_133 : f32 to vector<1x32xf32>
      %573 = arith.addf %572, %571 : vector<1x32xf32>
      %574 = arith.divf %572, %573 : vector<1x32xf32>
      %575 = vector.extract_strided_slice %568 {offsets = [0, 32], sizes = [1, 32], strides = [1, 1]} : vector<1x128xf32> to vector<1x32xf32>
      %576 = arith.negf %575 : vector<1x32xf32>
      %577 = math.exp %576 : vector<1x32xf32>
      %cst_134 = arith.constant 1.000000e+00 : f32
      %578 = vector.broadcast %cst_134 : f32 to vector<1x32xf32>
      %579 = arith.addf %578, %577 : vector<1x32xf32>
      %580 = arith.divf %578, %579 : vector<1x32xf32>
      %581 = vector.extract_strided_slice %568 {offsets = [0, 64], sizes = [1, 32], strides = [1, 1]} : vector<1x128xf32> to vector<1x32xf32>
      %582 = math.tanh %581 : vector<1x32xf32>
      %583 = vector.extract_strided_slice %568 {offsets = [0, 96], sizes = [1, 32], strides = [1, 1]} : vector<1x128xf32> to vector<1x32xf32>
      %584 = arith.negf %583 : vector<1x32xf32>
      %585 = math.exp %584 : vector<1x32xf32>
      %cst_135 = arith.constant 1.000000e+00 : f32
      %586 = vector.broadcast %cst_135 : f32 to vector<1x32xf32>
      %587 = arith.addf %586, %585 : vector<1x32xf32>
      %588 = arith.divf %586, %587 : vector<1x32xf32>
      %589 = arith.mulf %580, %537 : vector<1x32xf32>
      %590 = arith.mulf %574, %582 : vector<1x32xf32>
      %591 = arith.addf %589, %590 : vector<1x32xf32>
      %592 = math.tanh %591 : vector<1x32xf32>
      %593 = arith.mulf %588, %592 : vector<1x32xf32>
      %c6_i32_136 = arith.constant 6 : i32
      %594 = arith.cmpi sgt, %90, %c6_i32_136 : i32
      %595 = arith.select %594, %565, %534 : vector<1x32xf32>
      %596 = arith.select %594, %563, %535 : vector<1x32xf32>
      %597 = arith.select %594, %593, %536 : vector<1x32xf32>
      %598 = arith.select %594, %591, %537 : vector<1x32xf32>
      %599 = vector.extract_strided_slice %167 {offsets = [7, 0], sizes = [1, 128], strides = [1, 1]} : vector<8x128xf32> to vector<1x128xf32>
      %cst_137 = arith.constant dense<0.000000e+00> : vector<1x128xf32>
      %600 = tpu.matmul %595, %98, %cst_137 {dimension_numbers = #tpu.dot_dimension_numbers<[1], [0], [0], [1], [0, 0, 1, 1], [], []>} : vector<1x32xf32>, vector<32x128xf32>, vector<1x128xf32> -> vector<1x128xf32>
      %601 = arith.addf %599, %600 : vector<1x128xf32>
      %602 = vector.extract_strided_slice %601 {offsets = [0, 0], sizes = [1, 32], strides = [1, 1]} : vector<1x128xf32> to vector<1x32xf32>
      %603 = arith.negf %602 : vector<1x32xf32>
      %604 = math.exp %603 : vector<1x32xf32>
      %cst_138 = arith.constant 1.000000e+00 : f32
      %605 = vector.broadcast %cst_138 : f32 to vector<1x32xf32>
      %606 = arith.addf %605, %604 : vector<1x32xf32>
      %607 = arith.divf %605, %606 : vector<1x32xf32>
      %608 = vector.extract_strided_slice %601 {offsets = [0, 32], sizes = [1, 32], strides = [1, 1]} : vector<1x128xf32> to vector<1x32xf32>
      %609 = arith.negf %608 : vector<1x32xf32>
      %610 = math.exp %609 : vector<1x32xf32>
      %cst_139 = arith.constant 1.000000e+00 : f32
      %611 = vector.broadcast %cst_139 : f32 to vector<1x32xf32>
      %612 = arith.addf %611, %610 : vector<1x32xf32>
      %613 = arith.divf %611, %612 : vector<1x32xf32>
      %614 = vector.extract_strided_slice %601 {offsets = [0, 64], sizes = [1, 32], strides = [1, 1]} : vector<1x128xf32> to vector<1x32xf32>
      %615 = math.tanh %614 : vector<1x32xf32>
      %616 = vector.extract_strided_slice %601 {offsets = [0, 96], sizes = [1, 32], strides = [1, 1]} : vector<1x128xf32> to vector<1x32xf32>
      %617 = arith.negf %616 : vector<1x32xf32>
      %618 = math.exp %617 : vector<1x32xf32>
      %cst_140 = arith.constant 1.000000e+00 : f32
      %619 = vector.broadcast %cst_140 : f32 to vector<1x32xf32>
      %620 = arith.addf %619, %618 : vector<1x32xf32>
      %621 = arith.divf %619, %620 : vector<1x32xf32>
      %622 = arith.mulf %613, %596 : vector<1x32xf32>
      %623 = arith.mulf %607, %615 : vector<1x32xf32>
      %624 = arith.addf %622, %623 : vector<1x32xf32>
      %625 = math.tanh %624 : vector<1x32xf32>
      %626 = arith.mulf %621, %625 : vector<1x32xf32>
      %627 = tpu.concatenate %626, %597 in 1 : vector<1x32xf32>, vector<1x32xf32> -> vector<1x64xf32>
      %cst_141 = arith.constant dense<0.000000e+00> : vector<1x128xf32>
      %628 = tpu.matmul %627, %104, %cst_141 {dimension_numbers = #tpu.dot_dimension_numbers<[1], [0], [0], [1], [0, 0, 1, 1], [], []>} : vector<1x64xf32>, vector<64x128xf32>, vector<1x128xf32> -> vector<1x128xf32>
      %629 = arith.addf %628, %107 : vector<1x128xf32>
      %630 = vector.extract_strided_slice %629 {offsets = [0, 0], sizes = [1, 32], strides = [1, 1]} : vector<1x128xf32> to vector<1x32xf32>
      %631 = arith.negf %630 : vector<1x32xf32>
      %632 = math.exp %631 : vector<1x32xf32>
      %cst_142 = arith.constant 1.000000e+00 : f32
      %633 = vector.broadcast %cst_142 : f32 to vector<1x32xf32>
      %634 = arith.addf %633, %632 : vector<1x32xf32>
      %635 = arith.divf %633, %634 : vector<1x32xf32>
      %636 = vector.extract_strided_slice %629 {offsets = [0, 32], sizes = [1, 32], strides = [1, 1]} : vector<1x128xf32> to vector<1x32xf32>
      %637 = arith.negf %636 : vector<1x32xf32>
      %638 = math.exp %637 : vector<1x32xf32>
      %cst_143 = arith.constant 1.000000e+00 : f32
      %639 = vector.broadcast %cst_143 : f32 to vector<1x32xf32>
      %640 = arith.addf %639, %638 : vector<1x32xf32>
      %641 = arith.divf %639, %640 : vector<1x32xf32>
      %642 = vector.extract_strided_slice %629 {offsets = [0, 64], sizes = [1, 32], strides = [1, 1]} : vector<1x128xf32> to vector<1x32xf32>
      %643 = math.tanh %642 : vector<1x32xf32>
      %644 = vector.extract_strided_slice %629 {offsets = [0, 96], sizes = [1, 32], strides = [1, 1]} : vector<1x128xf32> to vector<1x32xf32>
      %645 = arith.negf %644 : vector<1x32xf32>
      %646 = math.exp %645 : vector<1x32xf32>
      %cst_144 = arith.constant 1.000000e+00 : f32
      %647 = vector.broadcast %cst_144 : f32 to vector<1x32xf32>
      %648 = arith.addf %647, %646 : vector<1x32xf32>
      %649 = arith.divf %647, %648 : vector<1x32xf32>
      %650 = arith.mulf %641, %598 : vector<1x32xf32>
      %651 = arith.mulf %635, %643 : vector<1x32xf32>
      %652 = arith.addf %650, %651 : vector<1x32xf32>
      %653 = math.tanh %652 : vector<1x32xf32>
      %654 = arith.mulf %649, %653 : vector<1x32xf32>
      %c7_i32_145 = arith.constant 7 : i32
      %655 = arith.cmpi sgt, %90, %c7_i32_145 : i32
      %656 = arith.select %655, %626, %595 : vector<1x32xf32>
      %657 = arith.select %655, %624, %596 : vector<1x32xf32>
      %658 = arith.select %655, %654, %597 : vector<1x32xf32>
      %659 = arith.select %655, %652, %598 : vector<1x32xf32>
      %660 = arith.index_cast %92 : i32 to index
      %c0_146 = arith.constant 0 : index
      %661 = vector.load %arg13[%660, %c0_146] : memref<64x32xf32, #tpu.memory_space<vmem>>, vector<1x32xf32>
      tpu.vector_store %arg13[%660, %c0_146], %658 {strides = array<i32>} : memref<64x32xf32, #tpu.memory_space<vmem>>, vector<1x32xf32>,
    }
    %c0_5 = arith.constant 0 : index
    %c0_6 = arith.constant 0 : index
    %5 = vector.load %arg11[%c0_5, %c0_6] : memref<1x32xf32, #tpu.memory_space<vmem>>, vector<1x32xf32>
    %6 = arith.mulf %5, %5 : vector<1x32xf32>
    %7 = vector.shape_cast %6 : vector<1x32xf32> to vector<1x1x32xf32>
    %cst = arith.constant dense<0.000000e+00> : vector<1xf32>
    %8 = vector.multi_reduction <add>, %7, %cst [1, 2] : vector<1x1x32xf32> to vector<1xf32>
    %9 = vector.shape_cast %8 : vector<1xf32> to vector<1x1x1xf32>
    %10 = vector.extract %9[0, 0, 0] : f32 from vector<1x1x1xf32>
    %c1 = arith.constant 1 : index
    %11 = memref.load %arg0[%c1] : memref<8xi32, #tpu.memory_space<smem>>
    %12 = arith.index_cast %11 : i32 to index
    %c0_7 = arith.constant 0 : index
    %13 = vector.load %arg13[%12, %c0_7] : memref<64x32xf32, #tpu.memory_space<vmem>>, vector<1x32xf32>
    %c2 = arith.constant 2 : index
    %14 = memref.load %arg0[%c2] : memref<8xi32, #tpu.memory_space<smem>>
    %15 = arith.index_cast %14 : i32 to index
    %c0_8 = arith.constant 0 : index
    %16 = vector.load %arg13[%15, %c0_8] : memref<64x32xf32, #tpu.memory_space<vmem>>, vector<1x32xf32>
    %c3 = arith.constant 3 : index
    %17 = memref.load %arg0[%c3] : memref<8xi32, #tpu.memory_space<smem>>
    %18 = arith.index_cast %17 : i32 to index
    %c0_9 = arith.constant 0 : index
    %19 = vector.load %arg13[%18, %c0_9] : memref<64x32xf32, #tpu.memory_space<vmem>>, vector<1x32xf32>
    %20 = arith.mulf %13, %5 : vector<1x32xf32>
    %21 = vector.shape_cast %20 : vector<1x32xf32> to vector<1x1x32xf32>
    %cst_10 = arith.constant dense<0.000000e+00> : vector<1xf32>
    %22 = vector.multi_reduction <add>, %21, %cst_10 [1, 2] : vector<1x1x32xf32> to vector<1xf32>
    %23 = vector.shape_cast %22 : vector<1xf32> to vector<1x1x1xf32>
    %24 = vector.extract %23[0, 0, 0] : f32 from vector<1x1x1xf32>
    %25 = arith.mulf %13, %13 : vector<1x32xf32>
    %26 = vector.shape_cast %25 : vector<1x32xf32> to vector<1x1x32xf32>
    %cst_11 = arith.constant dense<0.000000e+00> : vector<1xf32>
    %27 = vector.multi_reduction <add>, %26, %cst_11 [1, 2] : vector<1x1x32xf32> to vector<1xf32>
    %28 = vector.shape_cast %27 : vector<1xf32> to vector<1x1x1xf32>
    %29 = vector.extract %28[0, 0, 0] : f32 from vector<1x1x1xf32>
    %30 = arith.mulf %29, %10 : f32
    %31 = math.sqrt %30 : f32
    %cst_12 = arith.constant 9.99999993E-9 : f32
    %32 = arith.maximumf %31, %cst_12 : f32
    %33 = arith.divf %24, %32 : f32
    %34 = arith.mulf %16, %5 : vector<1x32xf32>
    %35 = vector.shape_cast %34 : vector<1x32xf32> to vector<1x1x32xf32>
    %cst_13 = arith.constant dense<0.000000e+00> : vector<1xf32>
    %36 = vector.multi_reduction <add>, %35, %cst_13 [1, 2] : vector<1x1x32xf32> to vector<1xf32>
    %37 = vector.shape_cast %36 : vector<1xf32> to vector<1x1x1xf32>
    %38 = vector.extract %37[0, 0, 0] : f32 from vector<1x1x1xf32>
    %39 = arith.mulf %16, %16 : vector<1x32xf32>
    %40 = vector.shape_cast %39 : vector<1x32xf32> to vector<1x1x32xf32>
    %cst_14 = arith.constant dense<0.000000e+00> : vector<1xf32>
    %41 = vector.multi_reduction <add>, %40, %cst_14 [1, 2] : vector<1x1x32xf32> to vector<1xf32>
    %42 = vector.shape_cast %41 : vector<1xf32> to vector<1x1x1xf32>
    %43 = vector.extract %42[0, 0, 0] : f32 from vector<1x1x1xf32>
    %44 = arith.mulf %43, %10 : f32
    %45 = math.sqrt %44 : f32
    %cst_15 = arith.constant 9.99999993E-9 : f32
    %46 = arith.maximumf %45, %cst_15 : f32
    %47 = arith.divf %38, %46 : f32
    %48 = arith.mulf %19, %5 : vector<1x32xf32>
    %49 = vector.shape_cast %48 : vector<1x32xf32> to vector<1x1x32xf32>
    %cst_16 = arith.constant dense<0.000000e+00> : vector<1xf32>
    %50 = vector.multi_reduction <add>, %49, %cst_16 [1, 2] : vector<1x1x32xf32> to vector<1xf32>
    %51 = vector.shape_cast %50 : vector<1xf32> to vector<1x1x1xf32>
    %52 = vector.extract %51[0, 0, 0] : f32 from vector<1x1x1xf32>
    %53 = arith.mulf %19, %19 : vector<1x32xf32>
    %54 = vector.shape_cast %53 : vector<1x32xf32> to vector<1x1x32xf32>
    %cst_17 = arith.constant dense<0.000000e+00> : vector<1xf32>
    %55 = vector.multi_reduction <add>, %54, %cst_17 [1, 2] : vector<1x1x32xf32> to vector<1xf32>
    %56 = vector.shape_cast %55 : vector<1xf32> to vector<1x1x1xf32>
    %57 = vector.extract %56[0, 0, 0] : f32 from vector<1x1x1xf32>
    %58 = arith.mulf %57, %10 : f32
    %59 = math.sqrt %58 : f32
    %cst_18 = arith.constant 9.99999993E-9 : f32
    %60 = arith.maximumf %59, %cst_18 : f32
    %61 = arith.divf %52, %60 : f32
    %62 = arith.maximumf %33, %47 : f32
    %63 = arith.maximumf %62, %61 : f32
    %64 = arith.subf %33, %63 : f32
    %65 = math.exp %64 : f32
    %66 = arith.subf %47, %63 : f32
    %67 = math.exp %66 : f32
    %68 = arith.subf %61, %63 : f32
    %69 = math.exp %68 : f32
    %70 = arith.addf %65, %67 : f32
    %71 = arith.addf %70, %69 : f32
    %cst_19 = arith.constant 1.000000e+00 : f32
    %72 = arith.divf %cst_19, %71 : f32
    %73 = vector.broadcast %65 : f32 to vector<1x32xf32>
    %74 = arith.mulf %73, %13 : vector<1x32xf32>
    %75 = vector.broadcast %67 : f32 to vector<1x32xf32>
    %76 = arith.mulf %75, %16 : vector<1x32xf32>
    %77 = arith.addf %74, %76 : vector<1x32xf32>
    %78 = vector.broadcast %69 : f32 to vector<1x32xf32>
    %79 = arith.mulf %78, %19 : vector<1x32xf32>
    %80 = arith.addf %77, %79 : vector<1x32xf32>
    %81 = vector.broadcast %72 : f32 to vector<1x32xf32>
    %82 = arith.mulf %80, %81 : vector<1x32xf32>
    %c0_20 = arith.constant 0 : index
    %c0_21 = arith.constant 0 : index
    %83 = vector.load %arg12[%c0_20, %c0_21] : memref<4x32xf32, #tpu.memory_space<vmem>>, vector<1x32xf32>
    tpu.vector_store %arg12[%c0_20, %c0_21], %82 {strides = array<i32>} : memref<4x32xf32, #tpu.memory_space<vmem>>, vector<1x32xf32>,
    %c1_22 = arith.constant 1 : index
    %c0_23 = arith.constant 0 : index
    %84 = vector.load %arg12[%c1_22, %c0_23] : memref<4x32xf32, #tpu.memory_space<vmem>>, vector<1x32xf32>
    tpu.vector_store %arg12[%c1_22, %c0_23], %13 {strides = array<i32>} : memref<4x32xf32, #tpu.memory_space<vmem>>, vector<1x32xf32>,
    %c2_24 = arith.constant 2 : index
    %c0_25 = arith.constant 0 : index
    %85 = vector.load %arg12[%c2_24, %c0_25] : memref<4x32xf32, #tpu.memory_space<vmem>>, vector<1x32xf32>
    tpu.vector_store %arg12[%c2_24, %c0_25], %16 {strides = array<i32>} : memref<4x32xf32, #tpu.memory_space<vmem>>, vector<1x32xf32>,
    %c3_26 = arith.constant 3 : index
    %c0_27 = arith.constant 0 : index
    %86 = vector.load %arg12[%c3_26, %c0_27] : memref<4x32xf32, #tpu.memory_space<vmem>>, vector<1x32xf32>
    tpu.vector_store %arg12[%c3_26, %c0_27], %19 {strides = array<i32>} : memref<4x32xf32, #tpu.memory_space<vmem>>, vector<1x32xf32>,
    return
  }
}

</mosaic_0001>

<llo_original>
// kernel: _forest_call.1
$region0: #{_forest_call.1}
  #allocation0 [shape = 'u32[]', space=smem, size = 0x4, offset = 0x4, fixed_abs, tag = 'smem constant byte address 0x4 - core index']
  #allocation1 [shape = 'u32[72,128]{1,0:T(1,128)}', space=vmem, size = 0x9000, scoped, tag = 'internal scratch']
  #allocation2 [shape = 'f32[64,32]{1,0:T(8,128)}', space=vmem, size = 0x8000, scoped, tag = 'scratch operand']
  #allocation3 [shape = 'f32[8,32]{1,0:T(8,128)}', space=vmem, size = 0x1000, scoped, tag = 'scratch operand']
  %s0 = inlined_call_operand.vmem [shape: s32[8], index: 0, kind: input, shape index: {}]
  %s1 = inlined_call_operand.vmem [shape: s32[16], index: 1, kind: input, shape index: {}]
  %s2 = inlined_call_operand.vmem [shape: s32[16], index: 2, kind: input, shape index: {}]
  %s3 = inlined_call_operand.vmem [shape: s32[16], index: 3, kind: input, shape index: {}]
  %s4 = inlined_call_operand.vmem [shape: s32[128], index: 4, kind: input, shape index: {}]
  %s5 = inlined_call_operand.vmem [shape: f32[64,32], index: 5, kind: input, shape index: {}]
  %s6 = inlined_call_operand.hbm [shape: f32[16,32,128], index: 6, kind: input, shape index: {}]
  %s7 = inlined_call_operand.hbm [shape: f32[16,32,128], index: 7, kind: input, shape index: {}]
  %s8 = inlined_call_operand.vmem [shape: f32[16,1,128], index: 8, kind: input, shape index: {}]
  %s9 = inlined_call_operand.hbm [shape: f32[16,64,128], index: 9, kind: input, shape index: {}]
  %s10 = inlined_call_operand.vmem [shape: f32[16,1,128], index: 10, kind: input, shape index: {}]
  %s11 = inlined_call_operand.vmem [shape: f32[1,32], index: 11, kind: input, shape index: {}]
  %s12 = inlined_call_operand.hbm [shape: f32[4,32], index: 12, kind: output, shape index: {}]
  %s13 = sld [smem:[#allocation0]]
  $region97: #{_forest_call.1} parent=0
    _
  %s15 = ssub.s32 1, %s13
  %s16 = scalar_select 0, %s15, %s13
  $region1: #{_forest_call.1} parent=0
    #allocation4 [shape = 'u8[512]{0}', space=smem, size = 0x200, scoped, tag = 'input window, operand 0, single buffered']
    #allocation5 [shape = 's32[1]{0}', space=sflag, size = 0x4, scoped, tag = 'scoped memory for _forest_call.1']
    #allocation6 [shape = 's32[1]{0}', space=sflag, size = 0x4, scoped, tag = 'scoped memory for _forest_call.1']
    #allocation7 [shape = 's32[1]{0}', space=sflag, size = 0x4, scoped, tag = 'scoped memory for _forest_call.1']
    #allocation8 [shape = 'u8[512]{0}', space=smem, size = 0x200, scoped, tag = 'input window, operand 1, single buffered']
    #allocation9 [shape = 's32[1]{0}', space=sflag, size = 0x4, scoped, tag = 'scoped memory for _forest_call.1']
    #allocation10 [shape = 'u8[512]{0}', space=smem, size = 0x200, scoped, tag = 'input window, operand 2, single buffered']
    #allocation11 [shape = 'u8[512]{0}', space=smem, size = 0x200, scoped, tag = 'input window, operand 3, single buffered']
    #allocation12 [shape = 's32[1]{0}', space=sflag, size = 0x4, scoped, tag = 'scoped memory for _forest_call.1']
    #allocation13 [shape = 'u8[512]{0}', space=smem, size = 0x200, scoped, tag = 'input window, operand 4, single buffered']
    #allocation14 [shape = 'u8[262144]{0}', space=vmem, size = 0x40000, scoped, tag = 'input window, operand 6, single buffered']
    #allocation15 [shape = 'u8[262144]{0}', space=vmem, size = 0x40000, scoped, tag = 'input window, operand 7, single buffered']
    #allocation16 [shape = 's32[1]{0}', space=sflag, size = 0x4, scoped, tag = 'scoped memory for _forest_call.1']
    #allocation17 [shape = 'u8[524288]{0}', space=vmem, size = 0x80000, scoped, tag = 'input window, operand 9, single buffered']
    #allocation18 [shape = 'u8[2048]{0}', space=vmem, size = 0x800, scoped, tag = 'output window, operand 0, single buffered']
    %17 = vsyncpa [#allocation7], 0
    %18 = vsyncpa [#allocation9], 0
    %19 = vsyncpa [#allocation12], 0
    %20 = vsyncpa [#allocation5], 0
    %21 = vsyncpa [#allocation16], 0
    %22 = vsyncpa [#allocation6], 0
    // Predicated region
    $region2: #{_forest_call.1} parent=1 // pred_check
      _
    $region3: #{_forest_call.1} parent=1 // pred_check_branch
      %24 = sbr.rel (0) target = $region5
    $region4: #{_forest_call.1} parent=1 // pred_region
      %26 = vsyncadd [#allocation7], 0
      %s28 = sshll.u32 %s0, 4
      %s29 = int_to_ptr.vmem [resolvable:$true] %s28
      %31 = dma.vmem_to_smem %s29, 16, [#allocation4], [#allocation7]
    $region5: #{_forest_call.1} parent=1 // pred_fallthru
      _
    // Predicated region
    $region6: #{_forest_call.1} parent=1 // pred_check
      _
    $region7: #{_forest_call.1} parent=1 // pred_check_branch
      %33 = sbr.rel (0) target = $region9
    $region8: #{_forest_call.1} parent=1 // pred_region
      %35 = vsyncadd [#allocation9], 0
      %s37 = sshll.u32 %s1, 4
      %s38 = int_to_ptr.vmem [resolvable:$true] %s37
      %40 = dma.vmem_to_smem %s38, 16, [#allocation8], [#allocation9]
    $region9: #{_forest_call.1} parent=1 // pred_fallthru
      _
    // Predicated region
    $region10: #{_forest_call.1} parent=1 // pred_check
      _
    $region11: #{_forest_call.1} parent=1 // pred_check_branch
      %42 = sbr.rel (0) target = $region13
    $region12: #{_forest_call.1} parent=1 // pred_region
      %44 = vsyncadd [#allocation9], 0
      %s46 = sshll.u32 %s2, 4
      %s47 = int_to_ptr.vmem [resolvable:$true] %s46
      %49 = dma.vmem_to_smem %s47, 16, [#allocation10], [#allocation9]
    $region13: #{_forest_call.1} parent=1 // pred_fallthru
      _
    // Predicated region
    $region14: #{_forest_call.1} parent=1 // pred_check
      _
    $region15: #{_forest_call.1} parent=1 // pred_check_branch
      %51 = sbr.rel (0) target = $region17
    $region16: #{_forest_call.1} parent=1 // pred_region
      %53 = vsyncadd [#allocation12], 0
      %s55 = sshll.u32 %s3, 4
      %s56 = int_to_ptr.vmem [resolvable:$true] %s55
      %58 = dma.vmem_to_smem %s56, 16, [#allocation11], [#allocation12]
    $region17: #{_forest_call.1} parent=1 // pred_fallthru
      _
    // Predicated region
    $region18: #{_forest_call.1} parent=1 // pred_check
      _
    $region19: #{_forest_call.1} parent=1 // pred_check_branch
      %60 = sbr.rel (0) target = $region21
    $region20: #{_forest_call.1} parent=1 // pred_region
      %62 = vsyncadd [#allocation12], 0
      %s64 = sshll.u32 %s4, 4
      %s65 = int_to_ptr.vmem [resolvable:$true] %s64
      %67 = dma.vmem_to_smem %s65, 16, [#allocation13], [#allocation12]
    $region21: #{_forest_call.1} parent=1 // pred_fallthru
      _
    // Predicated region
    $region22: #{_forest_call.1} parent=1 // pred_check
      _
    $region23: #{_forest_call.1} parent=1 // pred_check_branch
      %69 = sbr.rel (0) target = $region25
    $region24: #{_forest_call.1} parent=1 // pred_region
      _
    $region25: #{_forest_call.1} parent=1 // pred_fallthru
      _
    // Predicated region
    $region26: #{_forest_call.1} parent=1 // pred_check
      _
    $region27: #{_forest_call.1} parent=1 // pred_check_branch
      %71 = sbr.rel (0) target = $region29
    $region28: #{_forest_call.1} parent=1 // pred_region
      %73 = vsyncadd [#allocation5], 0
      %s74 = sshll.u32 %s6, 4
      %s75 = int_to_ptr.hbm [resolvable:$true] %s74
      %s76 = sshll.u32 [#allocation14], 4
      %s77 = int_to_ptr.vmem [resolvable:$true] %s76
      %82 = dma.hbm_to_vmem [thread:$0]  %s75, 8192, %s77, [#allocation5], 128, 128, 8
    $region29: #{_forest_call.1} parent=1 // pred_fallthru
      _
    // Predicated region
    $region30: #{_forest_call.1} parent=1 // pred_check
      _
    $region31: #{_forest_call.1} parent=1 // pred_check_branch
      %84 = sbr.rel (0) target = $region33
    $region32: #{_forest_call.1} parent=1 // pred_region
      %86 = vsyncadd [#allocation16], 0
      %s87 = sshll.u32 %s7, 4
      %s88 = int_to_ptr.hbm [resolvable:$true] %s87
      %s89 = sshll.u32 [#allocation15], 4
      %s90 = int_to_ptr.vmem [resolvable:$true] %s89
      %95 = dma.hbm_to_vmem [thread:$0]  %s88, 8192, %s90, [#allocation16], 128, 128, 8
    $region33: #{_forest_call.1} parent=1 // pred_fallthru
      _
    // Predicated region
    $region34: #{_forest_call.1} parent=1 // pred_check
      _
    $region35: #{_forest_call.1} parent=1 // pred_check_branch
      %97 = sbr.rel (0) target = $region37
    $region36: #{_forest_call.1} parent=1 // pred_region
      _
    $region37: #{_forest_call.1} parent=1 // pred_fallthru
      _
    // Predicated region
    $region38: #{_forest_call.1} parent=1 // pred_check
      _
    $region39: #{_forest_call.1} parent=1 // pred_check_branch
      %99 = sbr.rel (0) target = $region41
    $region40: #{_forest_call.1} parent=1 // pred_region
      %101 = vsyncadd [#allocation16], 0
      %s102 = sshll.u32 %s9, 4
      %s103 = int_to_ptr.hbm [resolvable:$true] %s102
      %s104 = sshll.u32 [#allocation17], 4
      %s105 = int_to_ptr.vmem [resolvable:$true] %s104
      %110 = dma.hbm_to_vmem [thread:$0]  %s103, 16384, %s105, [#allocation16], 128, 128, 8
    $region41: #{_forest_call.1} parent=1 // pred_fallthru
      _
    // Predicated region
    $region42: #{_forest_call.1} parent=1 // pred_check
      _
    $region43: #{_forest_call.1} parent=1 // pred_check_branch
      %112 = sbr.rel (0) target = $region45
    $region44: #{_forest_call.1} parent=1 // pred_region
      _
    $region45: #{_forest_call.1} parent=1 // pred_fallthru
      _
    // Predicated region
    $region46: #{_forest_call.1} parent=1 // pred_check
      _
    $region47: #{_forest_call.1} parent=1 // pred_check_branch
      %114 = sbr.rel (0) target = $region49
    $region48: #{_forest_call.1} parent=1 // pred_region
      _
    $region49: #{_forest_call.1} parent=1 // pred_fallthru
      _
    // Predicated region
    $region50: #{_forest_call.1} parent=1 // pred_check
      _
    $region51: #{_forest_call.1} parent=1 // pred_check_branch
      %116 = sbr.rel (0) target = $region53
    $region52: #{_forest_call.1} parent=1 // pred_region
      %118 = dma.done [#allocation7], 16
    $region53: #{_forest_call.1} parent=1 // pred_fallthru
      _
    // Predicated region
    $region54: #{_forest_call.1} parent=1 // pred_check
      _
    $region55: #{_forest_call.1} parent=1 // pred_check_branch
      %120 = sbr.rel (0) target = $region57
    $region56: #{_forest_call.1} parent=1 // pred_region
      %122 = dma.done [#allocation9], 16
    $region57: #{_forest_call.1} parent=1 // pred_fallthru
      _
    // Predicated region
    $region58: #{_forest_call.1} parent=1 // pred_check
      _
    $region59: #{_forest_call.1} parent=1 // pred_check_branch
      %124 = sbr.rel (0) target = $region61
    $region60: #{_forest_call.1} parent=1 // pred_region
      %126 = dma.done [#allocation9], 16
    $region61: #{_forest_call.1} parent=1 // pred_fallthru
      _
    // Predicated region
    $region62: #{_forest_call.1} parent=1 // pred_check
      _
    $region63: #{_forest_call.1} parent=1 // pred_check_branch
      %128 = sbr.rel (0) target = $region65
    $region64: #{_forest_call.1} parent=1 // pred_region
      %130 = dma.done [#allocation12], 16
    $region65: #{_forest_call.1} parent=1 // pred_fallthru
      _
    // Predicated region
    $region66: #{_forest_call.1} parent=1 // pred_check
      _
    $region67: #{_forest_call.1} parent=1 // pred_check_branch
      %132 = sbr.rel (0) target = $region69
    $region68: #{_forest_call.1} parent=1 // pred_region
      %134 = dma.done [#allocation12], 16
    $region69: #{_forest_call.1} parent=1 // pred_fallthru
      _
    // Predicated region
    $region70: #{_forest_call.1} parent=1 // pred_check
      _
    $region71: #{_forest_call.1} parent=1 // pred_check_branch
      %136 = sbr.rel (0) target = $region73
    $region72: #{_forest_call.1} parent=1 // pred_region
      %138 = dma.done [#allocation5], 8192
    $region73: #{_forest_call.1} parent=1 // pred_fallthru
      _
    // Predicated region
    $region74: #{_forest_call.1} parent=1 // pred_check
      _
    $region75: #{_forest_call.1} parent=1 // pred_check_branch
      %140 = sbr.rel (0) target = $region77
    $region76: #{_forest_call.1} parent=1 // pred_region
      %142 = dma.done [#allocation16], 8192
    $region77: #{_forest_call.1} parent=1 // pred_fallthru
      _
    // Predicated region
    $region78: #{_forest_call.1} parent=1 // pred_check
      _
    $region79: #{_forest_call.1} parent=1 // pred_check_branch
      %144 = sbr.rel (0) target = $region81
    $region80: #{_forest_call.1} parent=1 // pred_region
      %146 = dma.done [#allocation16], 16384
    $region81: #{_forest_call.1} parent=1 // pred_fallthru
      _
    %147 = sfence
    %v148 = vld [vmem:[%s5] sm:$0xff]
    %v149 = vld [vmem:[%s5 + $0x8] sm:$0xff]
    %v150 = vld [vmem:[%s5 + $0x10] sm:$0xff]
    %v151 = vld [vmem:[%s5 + $0x18] sm:$0xff]
    %v152 = vld [vmem:[%s5 + $0x20] sm:$0xff]
    %v153 = vld [vmem:[%s5 + $0x28] sm:$0xff]
    %v154 = vld [vmem:[%s5 + $0x30] sm:$0xff]
    %v155 = vld [vmem:[%s5 + $0x38] sm:$0xff]
    %vm156 = vcmask 261120
    %157 = vst.msk [vmem:[#allocation2] sm:$0xff] %vm156, %v148
    %158 = vst.msk [vmem:[#allocation2 + $0x8] sm:$0xff] %vm156, %v149
    %159 = vst.msk [vmem:[#allocation2 + $0x10] sm:$0xff] %vm156, %v150
    %160 = vst.msk [vmem:[#allocation2 + $0x18] sm:$0xff] %vm156, %v151
    %161 = vst.msk [vmem:[#allocation2 + $0x20] sm:$0xff] %vm156, %v152
    %162 = vst.msk [vmem:[#allocation2 + $0x28] sm:$0xff] %vm156, %v153
    %163 = vst.msk [vmem:[#allocation2 + $0x30] sm:$0xff] %vm156, %v154
    %164 = vst.msk [vmem:[#allocation2 + $0x38] sm:$0xff] %vm156, %v155
    %s165 = sld [smem:[#allocation4]]
    // While loop
    $region82: #{_forest_call.1} parent=1 // loop_pre_header
      _
    $region83: #{_forest_call.1} parent=1 // loop_header
      %s167 = sphi 0, %s169
      %p168 = scmp.ge.s32.totalorder %s167, %s165
    $region84: #{_forest_call.1} parent=1 // loop_header_branch
      %171 = sbr.rel (%p168) target = $region88
    $region85: #{_forest_call.1} parent=1 // loop_body
      %s172 = sld [smem:[#allocation8 + %s167]]
      %s173 = sld [smem:[#allocation10 + %s167]]
      %s174 = sld [smem:[#allocation11 + %s167]]
      %s175 = smul.u32 %s172, 32
      %s176 = scalar_lea.vmem [#allocation14], %s175
      %v177 = vld [vmem:[%s176] sm:$0xff]
      %v178 = vld [vmem:[%s176 + $0x8] sm:$0xff]
      %v179 = vld [vmem:[%s176 + $0x10] sm:$0xff]
      %v180 = vld [vmem:[%s176 + $0x18] sm:$0xff]
      %s181 = scalar_lea.vmem [#allocation15], %s175
      %v182 = vld [vmem:[%s181] sm:$0xff]
      %v183 = vld [vmem:[%s181 + $0x8] sm:$0xff]
      %v184 = vld [vmem:[%s181 + $0x10] sm:$0xff]
      %v185 = vld [vmem:[%s181 + $0x18] sm:$0xff]
      %s186 = scalar_lea.vmem %s8, %s172
      %v187 = vld [vmem:[%s186] sm:$0x1]
      %s188 = smul.u32 %s172, 64
      %s189 = scalar_lea.vmem [#allocation17], %s188
      %v190 = vld [vmem:[%s189] sm:$0xff]
      %v191 = vld [vmem:[%s189 + $0x8] sm:$0xff]
      %v192 = vld [vmem:[%s189 + $0x10] sm:$0xff]
      %v193 = vld [vmem:[%s189 + $0x18] sm:$0xff]
      %v194 = vld [vmem:[%s189 + $0x20] sm:$0xff]
      %v195 = vld [vmem:[%s189 + $0x28] sm:$0xff]
      %v196 = vld [vmem:[%s189 + $0x30] sm:$0xff]
      %v197 = vld [vmem:[%s189 + $0x38] sm:$0xff]
      %s198 = scalar_lea.vmem %s10, %s172
      %v199 = vld [vmem:[%s198] sm:$0x1]
      %s200 = smul.u32 %s167, 8
      %s201 = sld [smem:[#allocation13 + %s200]]
      %s202 = scalar_lea.vmem [#allocation2], %s201
      %v203 = vld [vmem:[%s202] sm:$0x1]
      %vm204 = vcmask 253952
      %205 = vst.msk [vmem:[#allocation3] sm:$0x1] %vm204, %v203
      %s206 = sadd.s32 %s200, 1
      %s207 = sld [smem:[#allocation13 + %s206]]
      %s208 = scalar_lea.vmem [#allocation2], %s207
      %v209 = vld [vmem:[%s208] sm:$0x1]
      %210 = vst.msk [vmem:[#allocation3 + $0x1] sm:$0x1] %vm204, %v209
      %s211 = sadd.s32 %s200, 2
      %s212 = sld [smem:[#allocation13 + %s211]]
      %s213 = scalar_lea.vmem [#allocation2], %s212
      %v214 = vld [vmem:[%s213] sm:$0x1]
      %215 = vst.msk [vmem:[#allocation3 + $0x2] sm:$0x1] %vm204, %v214
      %s216 = sadd.s32 %s200, 3
      %s217 = sld [smem:[#allocation13 + %s216]]
      %s218 = scalar_lea.vmem [#allocation2], %s217
      %v219 = vld [vmem:[%s218] sm:$0x1]
      %220 = vst.msk [vmem:[#allocation3 + $0x3] sm:$0x1] %vm204, %v219
      %s221 = sadd.s32 %s200, 4
      %s222 = sld [smem:[#allocation13 + %s221]]
      %s223 = scalar_lea.vmem [#allocation2], %s222
      %v224 = vld [vmem:[%s223] sm:$0x1]
      %225 = vst.msk [vmem:[#allocation3 + $0x4] sm:$0x1] %vm204, %v224
      %s226 = sadd.s32 %s200, 5
      %s227 = sld [smem:[#allocation13 + %s226]]
      %s228 = scalar_lea.vmem [#allocation2], %s227
      %v229 = vld [vmem:[%s228] sm:$0x1]
      %230 = vst.msk [vmem:[#allocation3 + $0x5] sm:$0x1] %vm204, %v229
      %s231 = sadd.s32 %s200, 6
      %s232 = sld [smem:[#allocation13 + %s231]]
      %s233 = scalar_lea.vmem [#allocation2], %s232
      %v234 = vld [vmem:[%s233] sm:$0x1]
      %235 = vst.msk [vmem:[#allocation3 + $0x6] sm:$0x1] %vm204, %v234
      %s236 = sadd.s32 %s200, 7
      %s237 = sld [smem:[#allocation13 + %s236]]
      %s238 = scalar_lea.vmem [#allocation2], %s237
      %v239 = vld [vmem:[%s238] sm:$0x1]
      %240 = vst.msk [vmem:[#allocation3 + $0x7] sm:$0x1] %vm204, %v239
      %v241 = vld [vmem:[#allocation3] sm:$0xff]
      %v243 = vperm.slane %v187, 0
      %v246 = vsel %vm156, %v241, 0
      %248 = vmatpush.msra.mxu0 0.0
      %249 = vmatpush.msra.mxu0 0.0
      %250 = vmatpush.msra.mxu0 0.0
      %251 = vmatpush.msra.mxu0 0.0
      %252 = vmatpush.msra.mxu0 0.0
      %253 = vmatpush.msra.mxu0 0.0
      %254 = vmatpush.msra.mxu0 0.0
      %255 = vmatpush.msra.mxu0 0.0
      %256 = vmatpush.msra.mxu0 0.0
      %257 = vmatpush.msra.mxu0 0.0
      %258 = vmatpush.msra.mxu0 0.0
      %259 = vmatpush.msra.mxu0 0.0
      %260 = vmatpush.msra.mxu0 %v180
      %261 = vmatpush.msra.mxu0 %v179
      %262 = vmatpush.msra.mxu0 %v178
      %263 = vmatpush.msra.mxu0 %v177
      %264 = vmatmul.f32.gmra.mxu0 %v246
      %v265 = vpop.f32.mrf.mxu0
      %v266 = vadd.f32 %v243, %v265
      %267 = vdwg.mxu0
      %v269 = vsel %vm156, 0.0, 0
      %271 = vmatpush.msra.mxu0 0.0
      %272 = vmatpush.msra.mxu0 0.0
      %273 = vmatpush.msra.mxu0 0.0
      %274 = vmatpush.msra.mxu0 0.0
      %275 = vmatpush.msra.mxu0 0.0
      %276 = vmatpush.msra.mxu0 0.0
      %277 = vmatpush.msra.mxu0 0.0
      %278 = vmatpush.msra.mxu0 0.0
      %279 = vmatpush.msra.mxu0 0.0
      %280 = vmatpush.msra.mxu0 0.0
      %281 = vmatpush.msra.mxu0 0.0
      %282 = vmatpush.msra.mxu0 0.0
      %283 = vmatpush.msra.mxu0 %v185
      %284 = vmatpush.msra.mxu0 %v184
      %285 = vmatpush.msra.mxu0 %v183
      %286 = vmatpush.msra.mxu0 %v182
      %287 = vmatmul.f32.gmra.mxu0 %v269
      %v288 = vpop.f32.mrf.mxu0
      %v289 = vadd.f32 0.0, %v288
      %290 = vdwg.mxu0
      %v291 = vadd.f32 %v266, %v289
      %v292 = vxor.u32 %v291, 2147483648
      %v293 = vmul.f32 %v292, 1.442695
      %v294 = vpow.pop %v293
      %v295 = vadd.f32 %v294, 1.0
      %v296 = vrcp.pop %v295
      %v297 = vmul.f32 %v295, %v296
      %v298 = vsub.f32 1.0, %v297
      %v299 = vmul.f32 %v296, %v298
      %v300 = vadd.f32 %v296, %v299
      %vm301 = vweird.f32 %v295
      %vm302 = vweird.f32 %v296
      %vm303 = vmor %vm301, %vm302
      %v304 = vsel %vm303, %v296, %v300
      %v305 = vand.u32 2147483647, %v295
      %vm306 = vcmp.eq.f32.partialorder %v305, 8.507059e+37
      %v307 = vand.u32 %v295, 2147483648
      %v308 = vor.u32 1.1754944e-38, %v307
      %v309 = vsel %vm306, %v308, %v304
      %v310 = vmul.f32 1.0, %v309
      %v311 = vtanh.pop %v291
      %v312 = vmul.f32 %v310, 0.0
      %314 = vrot.lane.b32.xlu0 %v311, 64
      %v315 = vpop.permute.xlu0 %314
      %v317 = vmul.f32 %v310, %v315
      %319 = vrot.lane.b32.xlu0 %v317, 32
      %v320 = vpop.permute.xlu0 %319
      %v322 = vadd.f32 %v312, %v320
      %v323 = vtanh.pop %v322
      %325 = vrot.lane.b32.xlu0 %v323, 64
      %v326 = vpop.permute.xlu0 %325
      %v328 = vmul.f32 %v310, %v326
      %330 = vrot.lane.b32.xlu0 %v328, 32
      %v331 = vpop.permute.xlu0 %330
      %v333 = vsel %vm156, %v331, 0.0
      %vm334 = vcmask 523264
      %v336 = vsel %vm334, %v333, 0
      %338 = vmatpush.msra.mxu0 0.0
      %339 = vmatpush.msra.mxu0 0.0
      %340 = vmatpush.msra.mxu0 0.0
      %341 = vmatpush.msra.mxu0 0.0
      %342 = vmatpush.msra.mxu0 0.0
      %343 = vmatpush.msra.mxu0 0.0
      %344 = vmatpush.msra.mxu0 0.0
      %345 = vmatpush.msra.mxu0 0.0
      %346 = vmatpush.msra.mxu0 %v197
      %347 = vmatpush.msra.mxu0 %v196
      %348 = vmatpush.msra.mxu0 %v195
      %349 = vmatpush.msra.mxu0 %v194
      %350 = vmatpush.msra.mxu0 %v193
      %351 = vmatpush.msra.mxu0 %v192
      %352 = vmatpush.msra.mxu0 %v191
      %353 = vmatpush.msra.mxu0 %v190
      %354 = vmatmul.f32.gmra.mxu0 %v336
      %v355 = vpop.f32.mrf.mxu0
      %v356 = vadd.f32 %v199, %v355
      %357 = vdwg.mxu0
      %v358 = vxor.u32 %v356, 2147483648
      %v359 = vmul.f32 %v358, 1.442695
      %v360 = vpow.pop %v359
      %v361 = vadd.f32 %v360, 1.0
      %v362 = vrcp.pop %v361
      %v363 = vmul.f32 %v361, %v362
      %v364 = vsub.f32 1.0, %v363
      %v365 = vmul.f32 %v362, %v364
      %v366 = vadd.f32 %v362, %v365
      %vm367 = vweird.f32 %v361
      %vm368 = vweird.f32 %v362
      %vm369 = vmor %vm367, %vm368
      %v370 = vsel %vm369, %v362, %v366
      %v371 = vand.u32 2147483647, %v361
      %vm372 = vcmp.eq.f32.partialorder %v371, 8.507059e+37
      %v373 = vand.u32 %v361, 2147483648
      %v374 = vor.u32 1.1754944e-38, %v373
      %v375 = vsel %vm372, %v374, %v370
      %v376 = vmul.f32 1.0, %v375
      %v377 = vtanh.pop %v356
      %v378 = vmul.f32 %v376, 0.0
      %380 = vrot.lane.b32.xlu0 %v377, 64
      %v381 = vpop.permute.xlu0 %380
      %v383 = vmul.f32 %v376, %v381
      %385 = vrot.lane.b32.xlu0 %v383, 32
      %v386 = vpop.permute.xlu0 %385
      %v388 = vadd.f32 %v378, %v386
      %v389 = vtanh.pop %v388
      %391 = vrot.lane.b32.xlu0 %v389, 64
      %v392 = vpop.permute.xlu0 %391
      %v394 = vmul.f32 %v376, %v392
      %p395 = scmp.gt.s32.totalorder %s173, 0
      %s396 = scalar_select %p395, 1, 0
      %v397 = vstv %s396
      %vm398 = vcmp.eq.s32.totalorder %v397, 1
      %v399 = vsel %vm398, %v328, 0.0
      %v400 = vsel %vm398, %v322, 0.0
      %v401 = vsel %vm398, %v394, 0.0
      %v402 = vsel %vm398, %v388, 0.0
      %404 = vrot.lane.b32.xlu0 %v399, 32
      %v405 = vpop.permute.xlu0 %404
      %v406 = vsel %vm156, %v405, 0
      %408 = vmatpush.msra.mxu0 0.0
      %409 = vmatpush.msra.mxu0 0.0
      %410 = vmatpush.msra.mxu0 0.0
      %411 = vmatpush.msra.mxu0 0.0
      %412 = vmatpush.msra.mxu0 0.0
      %413 = vmatpush.msra.mxu0 0.0
      %414 = vmatpush.msra.mxu0 0.0
      %415 = vmatpush.msra.mxu0 0.0
      %416 = vmatpush.msra.mxu0 0.0
      %417 = vmatpush.msra.mxu0 0.0
      %418 = vmatpush.msra.mxu0 0.0
      %419 = vmatpush.msra.mxu0 0.0
      %420 = vmatpush.msra.mxu0 %v185
      %421 = vmatpush.msra.mxu0 %v184
      %422 = vmatpush.msra.mxu0 %v183
      %423 = vmatpush.msra.mxu0 %v182
      %424 = vmatmul.f32.gmra.mxu0 %v406
      %v425 = vpop.f32.mrf.mxu0
      %v426 = vadd.f32 0.0, %v425
      %427 = vdwg.mxu0
      %v429 = vrot.slane %v426, 7
      %v431 = vadd.f32 %v266, %v429
      %v432 = vxor.u32 %v431, 2147483648
      %v433 = vmul.f32 %v432, 1.442695
      %v434 = vpow.pop %v433
      %v435 = vadd.f32 %v434, 1.0
      %v436 = vrcp.pop %v435
      %v437 = vmul.f32 %v435, %v436
      %v438 = vsub.f32 1.0, %v437
      %v439 = vmul.f32 %v436, %v438
      %v440 = vadd.f32 %v436, %v439
      %vm441 = vweird.f32 %v435
      %vm442 = vweird.f32 %v436
      %vm443 = vmor %vm441, %vm442
      %v444 = vsel %vm443, %v436, %v440
      %v445 = vand.u32 2147483647, %v435
      %vm446 = vcmp.eq.f32.partialorder %v445, 8.507059e+37
      %v447 = vand.u32 %v435, 2147483648
      %v448 = vor.u32 1.1754944e-38, %v447
      %v449 = vsel %vm446, %v448, %v444
      %v450 = vmul.f32 1.0, %v449
      %v451 = vtanh.pop %v431
      %v453 = vrot.slane %v400, 7
      %v455 = vmul.f32 %v450, %v453
      %457 = vrot.lane.b32.xlu0 %v451, 64
      %v458 = vpop.permute.xlu0 %457
      %v460 = vmul.f32 %v450, %v458
      %462 = vrot.lane.b32.xlu0 %v460, 32
      %v463 = vpop.permute.xlu0 %462
      %v465 = vadd.f32 %v455, %v463
      %v466 = vtanh.pop %v465
      %468 = vrot.lane.b32.xlu0 %v466, 64
      %v469 = vpop.permute.xlu0 %468
      %v471 = vmul.f32 %v450, %v469
      %473 = vrot.lane.b32.xlu0 %v471, 32
      %v474 = vpop.permute.xlu0 %473
      %v477 = vrot.slane %v401, 7
      %478 = vrot.lane.b32.xlu0 %v477, 64
      %v479 = vpop.permute.xlu0 %478
      %v481 = vsel %vm156, %v474, %v479
      %v483 = vrot.slane %v481, 1
      %v484 = vsel %vm334, %v483, 0
      %486 = vmatpush.msra.mxu0 0.0
      %487 = vmatpush.msra.mxu0 0.0
      %488 = vmatpush.msra.mxu0 0.0
      %489 = vmatpush.msra.mxu0 0.0
      %490 = vmatpush.msra.mxu0 0.0
      %491 = vmatpush.msra.mxu0 0.0
      %492 = vmatpush.msra.mxu0 0.0
      %493 = vmatpush.msra.mxu0 0.0
      %494 = vmatpush.msra.mxu0 %v197
      %495 = vmatpush.msra.mxu0 %v196
      %496 = vmatpush.msra.mxu0 %v195
      %497 = vmatpush.msra.mxu0 %v194
      %498 = vmatpush.msra.mxu0 %v193
      %499 = vmatpush.msra.mxu0 %v192
      %500 = vmatpush.msra.mxu0 %v191
      %501 = vmatpush.msra.mxu0 %v190
      %502 = vmatmul.f32.gmra.mxu0 %v484
      %v503 = vpop.f32.mrf.mxu0
      %v504 = vadd.f32 %v199, %v503
      %505 = vdwg.mxu0
      %v506 = vxor.u32 %v504, 2147483648
      %v507 = vmul.f32 %v506, 1.442695
      %v508 = vpow.pop %v507
      %v509 = vadd.f32 %v508, 1.0
      %v510 = vrcp.pop %v509
      %v511 = vmul.f32 %v509, %v510
      %v512 = vsub.f32 1.0, %v511
      %v513 = vmul.f32 %v510, %v512
      %v514 = vadd.f32 %v510, %v513
      %vm515 = vweird.f32 %v509
      %vm516 = vweird.f32 %v510
      %vm517 = vmor %vm515, %vm516
      %v518 = vsel %vm517, %v510, %v514
      %v519 = vand.u32 2147483647, %v509
      %vm520 = vcmp.eq.f32.partialorder %v519, 8.507059e+37
      %v521 = vand.u32 %v509, 2147483648
      %v522 = vor.u32 1.1754944e-38, %v521
      %v523 = vsel %vm520, %v522, %v518
      %v524 = vmul.f32 1.0, %v523
      %v525 = vtanh.pop %v504
      %v526 = vmul.f32 %v524, %v402
      %528 = vrot.lane.b32.xlu0 %v525, 64
      %v529 = vpop.permute.xlu0 %528
      %v531 = vmul.f32 %v524, %v529
      %533 = vrot.lane.b32.xlu0 %v531, 32
      %v534 = vpop.permute.xlu0 %533
      %v536 = vadd.f32 %v526, %v534
      %v537 = vtanh.pop %v536
      %539 = vrot.lane.b32.xlu0 %v537, 64
      %v540 = vpop.permute.xlu0 %539
      %v542 = vmul.f32 %v524, %v540
      %p543 = scmp.gt.s32.totalorder %s173, 1
      %s544 = scalar_select %p543, 1, 0
      %v545 = vstv %s544
      %vm546 = vcmp.eq.s32.totalorder %v545, 1
      %v547 = vrot.slane %v399, 7
      %v549 = vsel %vm546, %v471, %v547
      %v550 = vsel %vm546, %v465, %v453
      %v551 = vsel %vm546, %v542, %v401
      %v552 = vsel %vm546, %v536, %v402
      %v554 = vrot.slane %v549, 1
      %555 = vrot.lane.b32.xlu0 %v554, 32
      %v556 = vpop.permute.xlu0 %555
      %v557 = vsel %vm156, %v556, 0
      %559 = vmatpush.msra.mxu0 0.0
      %560 = vmatpush.msra.mxu0 0.0
      %561 = vmatpush.msra.mxu0 0.0
      %562 = vmatpush.msra.mxu0 0.0
      %563 = vmatpush.msra.mxu0 0.0
      %564 = vmatpush.msra.mxu0 0.0
      %565 = vmatpush.msra.mxu0 0.0
      %566 = vmatpush.msra.mxu0 0.0
      %567 = vmatpush.msra.mxu0 0.0
      %568 = vmatpush.msra.mxu0 0.0
      %569 = vmatpush.msra.mxu0 0.0
      %570 = vmatpush.msra.mxu0 0.0
      %571 = vmatpush.msra.mxu0 %v185
      %572 = vmatpush.msra.mxu0 %v184
      %573 = vmatpush.msra.mxu0 %v183
      %574 = vmatpush.msra.mxu0 %v182
      %575 = vmatmul.f32.gmra.mxu0 %v557
      %v576 = vpop.f32.mrf.mxu0
      %v577 = vadd.f32 0.0, %v576
      %578 = vdwg.mxu0
      %v580 = vrot.slane %v577, 6
      %v582 = vadd.f32 %v266, %v580
      %v583 = vxor.u32 %v582, 2147483648
      %v584 = vmul.f32 %v583, 1.442695
      %v585 = vpow.pop %v584
      %v586 = vadd.f32 %v585, 1.0
      %v587 = vrcp.pop %v586
      %v588 = vmul.f32 %v586, %v587
      %v589 = vsub.f32 1.0, %v588
      %v590 = vmul.f32 %v587, %v589
      %v591 = vadd.f32 %v587, %v590
      %vm592 = vweird.f32 %v586
      %vm593 = vweird.f32 %v587
      %vm594 = vmor %vm592, %vm593
      %v595 = vsel %vm594, %v587, %v591
      %v596 = vand.u32 2147483647, %v586
      %vm597 = vcmp.eq.f32.partialorder %v596, 8.507059e+37
      %v598 = vand.u32 %v586, 2147483648
      %v599 = vor.u32 1.1754944e-38, %v598
      %v600 = vsel %vm597, %v599, %v595
      %v601 = vmul.f32 1.0, %v600
      %v602 = vtanh.pop %v582
      %v604 = vrot.slane %v550, 7
      %v606 = vmul.f32 %v601, %v604
      %608 = vrot.lane.b32.xlu0 %v602, 64
      %v609 = vpop.permute.xlu0 %608
      %v611 = vmul.f32 %v601, %v609
      %613 = vrot.lane.b32.xlu0 %v611, 32
      %v614 = vpop.permute.xlu0 %613
      %v616 = vadd.f32 %v606, %v614
      %v617 = vtanh.pop %v616
      %619 = vrot.lane.b32.xlu0 %v617, 64
      %v620 = vpop.permute.xlu0 %619
      %v622 = vmul.f32 %v601, %v620
      %624 = vrot.lane.b32.xlu0 %v622, 32
      %v625 = vpop.permute.xlu0 %624
      %v628 = vrot.slane %v551, 6
      %629 = vrot.lane.b32.xlu0 %v628, 64
      %v630 = vpop.permute.xlu0 %629
      %v632 = vsel %vm156, %v625, %v630
      %v634 = vrot.slane %v632, 2
      %v635 = vsel %vm334, %v634, 0
      %637 = vmatpush.msra.mxu0 0.0
      %638 = vmatpush.msra.mxu0 0.0
      %639 = vmatpush.msra.mxu0 0.0
      %640 = vmatpush.msra.mxu0 0.0
      %641 = vmatpush.msra.mxu0 0.0
      %642 = vmatpush.msra.mxu0 0.0
      %643 = vmatpush.msra.mxu0 0.0
      %644 = vmatpush.msra.mxu0 0.0
      %645 = vmatpush.msra.mxu0 %v197
      %646 = vmatpush.msra.mxu0 %v196
      %647 = vmatpush.msra.mxu0 %v195
      %648 = vmatpush.msra.mxu0 %v194
      %649 = vmatpush.msra.mxu0 %v193
      %650 = vmatpush.msra.mxu0 %v192
      %651 = vmatpush.msra.mxu0 %v191
      %652 = vmatpush.msra.mxu0 %v190
      %653 = vmatmul.f32.gmra.mxu0 %v635
      %v654 = vpop.f32.mrf.mxu0
      %v655 = vadd.f32 %v199, %v654
      %656 = vdwg.mxu0
      %v657 = vxor.u32 %v655, 2147483648
      %v658 = vmul.f32 %v657, 1.442695
      %v659 = vpow.pop %v658
      %v660 = vadd.f32 %v659, 1.0
      %v661 = vrcp.pop %v660
      %v662 = vmul.f32 %v660, %v661
      %v663 = vsub.f32 1.0, %v662
      %v664 = vmul.f32 %v661, %v663
      %v665 = vadd.f32 %v661, %v664
      %vm666 = vweird.f32 %v660
      %vm667 = vweird.f32 %v661
      %vm668 = vmor %vm666, %vm667
      %v669 = vsel %vm668, %v661, %v665
      %v670 = vand.u32 2147483647, %v660
      %vm671 = vcmp.eq.f32.partialorder %v670, 8.507059e+37
      %v672 = vand.u32 %v660, 2147483648
      %v673 = vor.u32 1.1754944e-38, %v672
      %v674 = vsel %vm671, %v673, %v669
      %v675 = vmul.f32 1.0, %v674
      %v676 = vtanh.pop %v655
      %v677 = vmul.f32 %v675, %v552
      %679 = vrot.lane.b32.xlu0 %v676, 64
      %v680 = vpop.permute.xlu0 %679
      %v682 = vmul.f32 %v675, %v680
      %684 = vrot.lane.b32.xlu0 %v682, 32
      %v685 = vpop.permute.xlu0 %684
      %v687 = vadd.f32 %v677, %v685
      %v688 = vtanh.pop %v687
      %690 = vrot.lane.b32.xlu0 %v688, 64
      %v691 = vpop.permute.xlu0 %690
      %v693 = vmul.f32 %v675, %v691
      %p694 = scmp.gt.s32.totalorder %s173, 2
      %s695 = scalar_select %p694, 1, 0
      %v696 = vstv %s695
      %vm697 = vcmp.eq.s32.totalorder %v696, 1
      %v698 = vrot.slane %v549, 7
      %v700 = vsel %vm697, %v622, %v698
      %v701 = vsel %vm697, %v616, %v604
      %v702 = vsel %vm697, %v693, %v551
      %v703 = vsel %vm697, %v687, %v552
      %v705 = vrot.slane %v700, 2
      %706 = vrot.lane.b32.xlu0 %v705, 32
      %v707 = vpop.permute.xlu0 %706
      %v708 = vsel %vm156, %v707, 0
      %710 = vmatpush.msra.mxu0 0.0
      %711 = vmatpush.msra.mxu0 0.0
      %712 = vmatpush.msra.mxu0 0.0
      %713 = vmatpush.msra.mxu0 0.0
      %714 = vmatpush.msra.mxu0 0.0
      %715 = vmatpush.msra.mxu0 0.0
      %716 = vmatpush.msra.mxu0 0.0
      %717 = vmatpush.msra.mxu0 0.0
      %718 = vmatpush.msra.mxu0 0.0
      %719 = vmatpush.msra.mxu0 0.0
      %720 = vmatpush.msra.mxu0 0.0
      %721 = vmatpush.msra.mxu0 0.0
      %722 = vmatpush.msra.mxu0 %v185
      %723 = vmatpush.msra.mxu0 %v184
      %724 = vmatpush.msra.mxu0 %v183
      %725 = vmatpush.msra.mxu0 %v182
      %726 = vmatmul.f32.gmra.mxu0 %v708
      %v727 = vpop.f32.mrf.mxu0
      %v728 = vadd.f32 0.0, %v727
      %729 = vdwg.mxu0
      %v731 = vrot.slane %v728, 5
      %v733 = vadd.f32 %v266, %v731
      %v734 = vxor.u32 %v733, 2147483648
      %v735 = vmul.f32 %v734, 1.442695
      %v736 = vpow.pop %v735
      %v737 = vadd.f32 %v736, 1.0
      %v738 = vrcp.pop %v737
      %v739 = vmul.f32 %v737, %v738
      %v740 = vsub.f32 1.0, %v739
      %v741 = vmul.f32 %v738, %v740
      %v742 = vadd.f32 %v738, %v741
      %vm743 = vweird.f32 %v737
      %vm744 = vweird.f32 %v738
      %vm745 = vmor %vm743, %vm744
      %v746 = vsel %vm745, %v738, %v742
      %v747 = vand.u32 2147483647, %v737
      %vm748 = vcmp.eq.f32.partialorder %v747, 8.507059e+37
      %v749 = vand.u32 %v737, 2147483648
      %v750 = vor.u32 1.1754944e-38, %v749
      %v751 = vsel %vm748, %v750, %v746
      %v752 = vmul.f32 1.0, %v751
      %v753 = vtanh.pop %v733
      %v755 = vrot.slane %v701, 7
      %v757 = vmul.f32 %v752, %v755
      %759 = vrot.lane.b32.xlu0 %v753, 64
      %v760 = vpop.permute.xlu0 %759
      %v762 = vmul.f32 %v752, %v760
      %764 = vrot.lane.b32.xlu0 %v762, 32
      %v765 = vpop.permute.xlu0 %764
      %v767 = vadd.f32 %v757, %v765
      %v768 = vtanh.pop %v767
      %770 = vrot.lane.b32.xlu0 %v768, 64
      %v771 = vpop.permute.xlu0 %770
      %v773 = vmul.f32 %v752, %v771
      %775 = vrot.lane.b32.xlu0 %v773, 32
      %v776 = vpop.permute.xlu0 %775
      %v779 = vrot.slane %v702, 5
      %780 = vrot.lane.b32.xlu0 %v779, 64
      %v781 = vpop.permute.xlu0 %780
      %v783 = vsel %vm156, %v776, %v781
      %v785 = vrot.slane %v783, 3
      %v786 = vsel %vm334, %v785, 0
      %788 = vmatpush.msra.mxu0 0.0
      %789 = vmatpush.msra.mxu0 0.0
      %790 = vmatpush.msra.mxu0 0.0
      %791 = vmatpush.msra.mxu0 0.0
      %792 = vmatpush.msra.mxu0 0.0
      %793 = vmatpush.msra.mxu0 0.0
      %794 = vmatpush.msra.mxu0 0.0
      %795 = vmatpush.msra.mxu0 0.0
      %796 = vmatpush.msra.mxu0 %v197
      %797 = vmatpush.msra.mxu0 %v196
      %798 = vmatpush.msra.mxu0 %v195
      %799 = vmatpush.msra.mxu0 %v194
      %800 = vmatpush.msra.mxu0 %v193
      %801 = vmatpush.msra.mxu0 %v192
      %802 = vmatpush.msra.mxu0 %v191
      %803 = vmatpush.msra.mxu0 %v190
      %804 = vmatmul.f32.gmra.mxu0 %v786
      %v805 = vpop.f32.mrf.mxu0
      %v806 = vadd.f32 %v199, %v805
      %807 = vdwg.mxu0
      %v808 = vxor.u32 %v806, 2147483648
      %v809 = vmul.f32 %v808, 1.442695
      %v810 = vpow.pop %v809
      %v811 = vadd.f32 %v810, 1.0
      %v812 = vrcp.pop %v811
      %v813 = vmul.f32 %v811, %v812
      %v814 = vsub.f32 1.0, %v813
      %v815 = vmul.f32 %v812, %v814
      %v816 = vadd.f32 %v812, %v815
      %vm817 = vweird.f32 %v811
      %vm818 = vweird.f32 %v812
      %vm819 = vmor %vm817, %vm818
      %v820 = vsel %vm819, %v812, %v816
      %v821 = vand.u32 2147483647, %v811
      %vm822 = vcmp.eq.f32.partialorder %v821, 8.507059e+37
      %v823 = vand.u32 %v811, 2147483648
      %v824 = vor.u32 1.1754944e-38, %v823
      %v825 = vsel %vm822, %v824, %v820
      %v826 = vmul.f32 1.0, %v825
      %v827 = vtanh.pop %v806
      %v828 = vmul.f32 %v826, %v703
      %830 = vrot.lane.b32.xlu0 %v827, 64
      %v831 = vpop.permute.xlu0 %830
      %v833 = vmul.f32 %v826, %v831
      %835 = vrot.lane.b32.xlu0 %v833, 32
      %v836 = vpop.permute.xlu0 %835
      %v838 = vadd.f32 %v828, %v836
      %v839 = vtanh.pop %v838
      %841 = vrot.lane.b32.xlu0 %v839, 64
      %v842 = vpop.permute.xlu0 %841
      %v844 = vmul.f32 %v826, %v842
      %p845 = scmp.gt.s32.totalorder %s173, 3
      %s846 = scalar_select %p845, 1, 0
      %v847 = vstv %s846
      %vm848 = vcmp.eq.s32.totalorder %v847, 1
      %v849 = vrot.slane %v700, 7
      %v851 = vsel %vm848, %v773, %v849
      %v852 = vsel %vm848, %v767, %v755
      %v853 = vsel %vm848, %v844, %v702
      %v854 = vsel %vm848, %v838, %v703
      %v856 = vrot.slane %v851, 3
      %857 = vrot.lane.b32.xlu0 %v856, 32
      %v858 = vpop.permute.xlu0 %857
      %v859 = vsel %vm156, %v858, 0
      %861 = vmatpush.msra.mxu0 0.0
      %862 = vmatpush.msra.mxu0 0.0
      %863 = vmatpush.msra.mxu0 0.0
      %864 = vmatpush.msra.mxu0 0.0
      %865 = vmatpush.msra.mxu0 0.0
      %866 = vmatpush.msra.mxu0 0.0
      %867 = vmatpush.msra.mxu0 0.0
      %868 = vmatpush.msra.mxu0 0.0
      %869 = vmatpush.msra.mxu0 0.0
      %870 = vmatpush.msra.mxu0 0.0
      %871 = vmatpush.msra.mxu0 0.0
      %872 = vmatpush.msra.mxu0 0.0
      %873 = vmatpush.msra.mxu0 %v185
      %874 = vmatpush.msra.mxu0 %v184
      %875 = vmatpush.msra.mxu0 %v183
      %876 = vmatpush.msra.mxu0 %v182
      %877 = vmatmul.f32.gmra.mxu0 %v859
      %v878 = vpop.f32.mrf.mxu0
      %v879 = vadd.f32 0.0, %v878
      %880 = vdwg.mxu0
      %v882 = vrot.slane %v879, 4
      %v884 = vadd.f32 %v266, %v882
      %v885 = vxor.u32 %v884, 2147483648
      %v886 = vmul.f32 %v885, 1.442695
      %v887 = vpow.pop %v886
      %v888 = vadd.f32 %v887, 1.0
      %v889 = vrcp.pop %v888
      %v890 = vmul.f32 %v888, %v889
      %v891 = vsub.f32 1.0, %v890
      %v892 = vmul.f32 %v889, %v891
      %v893 = vadd.f32 %v889, %v892
      %vm894 = vweird.f32 %v888
      %vm895 = vweird.f32 %v889
      %vm896 = vmor %vm894, %vm895
      %v897 = vsel %vm896, %v889, %v893
      %v898 = vand.u32 2147483647, %v888
      %vm899 = vcmp.eq.f32.partialorder %v898, 8.507059e+37
      %v900 = vand.u32 %v888, 2147483648
      %v901 = vor.u32 1.1754944e-38, %v900
      %v902 = vsel %vm899, %v901, %v897
      %v903 = vmul.f32 1.0, %v902
      %v904 = vtanh.pop %v884
      %v906 = vrot.slane %v852, 7
      %v908 = vmul.f32 %v903, %v906
      %910 = vrot.lane.b32.xlu0 %v904, 64
      %v911 = vpop.permute.xlu0 %910
      %v913 = vmul.f32 %v903, %v911
      %915 = vrot.lane.b32.xlu0 %v913, 32
      %v916 = vpop.permute.xlu0 %915
      %v918 = vadd.f32 %v908, %v916
      %v919 = vtanh.pop %v918
      %921 = vrot.lane.b32.xlu0 %v919, 64
      %v922 = vpop.permute.xlu0 %921
      %v924 = vmul.f32 %v903, %v922
      %926 = vrot.lane.b32.xlu0 %v924, 32
      %v927 = vpop.permute.xlu0 %926
      %v930 = vrot.slane %v853, 4
      %931 = vrot.lane.b32.xlu0 %v930, 64
      %v932 = vpop.permute.xlu0 %931
      %v934 = vsel %vm156, %v927, %v932
      %v936 = vrot.slane %v934, 4
      %v937 = vsel %vm334, %v936, 0
      %939 = vmatpush.msra.mxu0 0.0
      %940 = vmatpush.msra.mxu0 0.0
      %941 = vmatpush.msra.mxu0 0.0
      %942 = vmatpush.msra.mxu0 0.0
      %943 = vmatpush.msra.mxu0 0.0
      %944 = vmatpush.msra.mxu0 0.0
      %945 = vmatpush.msra.mxu0 0.0
      %946 = vmatpush.msra.mxu0 0.0
      %947 = vmatpush.msra.mxu0 %v197
      %948 = vmatpush.msra.mxu0 %v196
      %949 = vmatpush.msra.mxu0 %v195
      %950 = vmatpush.msra.mxu0 %v194
      %951 = vmatpush.msra.mxu0 %v193
      %952 = vmatpush.msra.mxu0 %v192
      %953 = vmatpush.msra.mxu0 %v191
      %954 = vmatpush.msra.mxu0 %v190
      %955 = vmatmul.f32.gmra.mxu0 %v937
      %v956 = vpop.f32.mrf.mxu0
      %v957 = vadd.f32 %v199, %v956
      %958 = vdwg.mxu0
      %v959 = vxor.u32 %v957, 2147483648
      %v960 = vmul.f32 %v959, 1.442695
      %v961 = vpow.pop %v960
      %v962 = vadd.f32 %v961, 1.0
      %v963 = vrcp.pop %v962
      %v964 = vmul.f32 %v962, %v963
      %v965 = vsub.f32 1.0, %v964
      %v966 = vmul.f32 %v963, %v965
      %v967 = vadd.f32 %v963, %v966
      %vm968 = vweird.f32 %v962
      %vm969 = vweird.f32 %v963
      %vm970 = vmor %vm968, %vm969
      %v971 = vsel %vm970, %v963, %v967
      %v972 = vand.u32 2147483647, %v962
      %vm973 = vcmp.eq.f32.partialorder %v972, 8.507059e+37
      %v974 = vand.u32 %v962, 2147483648
      %v975 = vor.u32 1.1754944e-38, %v974
      %v976 = vsel %vm973, %v975, %v971
      %v977 = vmul.f32 1.0, %v976
      %v978 = vtanh.pop %v957
      %v979 = vmul.f32 %v977, %v854
      %981 = vrot.lane.b32.xlu0 %v978, 64
      %v982 = vpop.permute.xlu0 %981
      %v984 = vmul.f32 %v977, %v982
      %986 = vrot.lane.b32.xlu0 %v984, 32
      %v987 = vpop.permute.xlu0 %986
      %v989 = vadd.f32 %v979, %v987
      %v990 = vtanh.pop %v989
      %992 = vrot.lane.b32.xlu0 %v990, 64
      %v993 = vpop.permute.xlu0 %992
      %v995 = vmul.f32 %v977, %v993
      %p996 = scmp.gt.s32.totalorder %s173, 4
      %s997 = scalar_select %p996, 1, 0
      %v998 = vstv %s997
      %vm999 = vcmp.eq.s32.totalorder %v998, 1
      %v1000 = vrot.slane %v851, 7
      %v1002 = vsel %vm999, %v924, %v1000
      %v1003 = vsel %vm999, %v918, %v906
      %v1004 = vsel %vm999, %v995, %v853
      %v1005 = vsel %vm999, %v989, %v854
      %v1007 = vrot.slane %v1002, 4
      %1008 = vrot.lane.b32.xlu0 %v1007, 32
      %v1009 = vpop.permute.xlu0 %1008
      %v1010 = vsel %vm156, %v1009, 0
      %1012 = vmatpush.msra.mxu0 0.0
      %1013 = vmatpush.msra.mxu0 0.0
      %1014 = vmatpush.msra.mxu0 0.0
      %1015 = vmatpush.msra.mxu0 0.0
      %1016 = vmatpush.msra.mxu0 0.0
      %1017 = vmatpush.msra.mxu0 0.0
      %1018 = vmatpush.msra.mxu0 0.0
      %1019 = vmatpush.msra.mxu0 0.0
      %1020 = vmatpush.msra.mxu0 0.0
      %1021 = vmatpush.msra.mxu0 0.0
      %1022 = vmatpush.msra.mxu0 0.0
      %1023 = vmatpush.msra.mxu0 0.0
      %1024 = vmatpush.msra.mxu0 %v185
      %1025 = vmatpush.msra.mxu0 %v184
      %1026 = vmatpush.msra.mxu0 %v183
      %1027 = vmatpush.msra.mxu0 %v182
      %1028 = vmatmul.f32.gmra.mxu0 %v1010
      %v1029 = vpop.f32.mrf.mxu0
      %v1030 = vadd.f32 0.0, %v1029
      %1031 = vdwg.mxu0
      %v1033 = vrot.slane %v1030, 3
      %v1035 = vadd.f32 %v266, %v1033
      %v1036 = vxor.u32 %v1035, 2147483648
      %v1037 = vmul.f32 %v1036, 1.442695
      %v1038 = vpow.pop %v1037
      %v1039 = vadd.f32 %v1038, 1.0
      %v1040 = vrcp.pop %v1039
      %v1041 = vmul.f32 %v1039, %v1040
      %v1042 = vsub.f32 1.0, %v1041
      %v1043 = vmul.f32 %v1040, %v1042
      %v1044 = vadd.f32 %v1040, %v1043
      %vm1045 = vweird.f32 %v1039
      %vm1046 = vweird.f32 %v1040
      %vm1047 = vmor %vm1045, %vm1046
      %v1048 = vsel %vm1047, %v1040, %v1044
      %v1049 = vand.u32 2147483647, %v1039
      %vm1050 = vcmp.eq.f32.partialorder %v1049, 8.507059e+37
      %v1051 = vand.u32 %v1039, 2147483648
      %v1052 = vor.u32 1.1754944e-38, %v1051
      %v1053 = vsel %vm1050, %v1052, %v1048
      %v1054 = vmul.f32 1.0, %v1053
      %v1055 = vtanh.pop %v1035
      %v1057 = vrot.slane %v1003, 7
      %v1059 = vmul.f32 %v1054, %v1057
      %1061 = vrot.lane.b32.xlu0 %v1055, 64
      %v1062 = vpop.permute.xlu0 %1061
      %v1064 = vmul.f32 %v1054, %v1062
      %1066 = vrot.lane.b32.xlu0 %v1064, 32
      %v1067 = vpop.permute.xlu0 %1066
      %v1069 = vadd.f32 %v1059, %v1067
      %v1070 = vtanh.pop %v1069
      %1072 = vrot.lane.b32.xlu0 %v1070, 64
      %v1073 = vpop.permute.xlu0 %1072
      %v1075 = vmul.f32 %v1054, %v1073
      %1077 = vrot.lane.b32.xlu0 %v1075, 32
      %v1078 = vpop.permute.xlu0 %1077
      %v1081 = vrot.slane %v1004, 3
      %1082 = vrot.lane.b32.xlu0 %v1081, 64
      %v1083 = vpop.permute.xlu0 %1082
      %v1085 = vsel %vm156, %v1078, %v1083
      %v1087 = vrot.slane %v1085, 5
      %v1088 = vsel %vm334, %v1087, 0
      %1090 = vmatpush.msra.mxu0 0.0
      %1091 = vmatpush.msra.mxu0 0.0
      %1092 = vmatpush.msra.mxu0 0.0
      %1093 = vmatpush.msra.mxu0 0.0
      %1094 = vmatpush.msra.mxu0 0.0
      %1095 = vmatpush.msra.mxu0 0.0
      %1096 = vmatpush.msra.mxu0 0.0
      %1097 = vmatpush.msra.mxu0 0.0
      %1098 = vmatpush.msra.mxu0 %v197
      %1099 = vmatpush.msra.mxu0 %v196
      %1100 = vmatpush.msra.mxu0 %v195
      %1101 = vmatpush.msra.mxu0 %v194
      %1102 = vmatpush.msra.mxu0 %v193
      %1103 = vmatpush.msra.mxu0 %v192
      %1104 = vmatpush.msra.mxu0 %v191
      %1105 = vmatpush.msra.mxu0 %v190
      %1106 = vmatmul.f32.gmra.mxu0 %v1088
      %v1107 = vpop.f32.mrf.mxu0
      %v1108 = vadd.f32 %v199, %v1107
      %1109 = vdwg.mxu0
      %v1110 = vxor.u32 %v1108, 2147483648
      %v1111 = vmul.f32 %v1110, 1.442695
      %v1112 = vpow.pop %v1111
      %v1113 = vadd.f32 %v1112, 1.0
      %v1114 = vrcp.pop %v1113
      %v1115 = vmul.f32 %v1113, %v1114
      %v1116 = vsub.f32 1.0, %v1115
      %v1117 = vmul.f32 %v1114, %v1116
      %v1118 = vadd.f32 %v1114, %v1117
      %vm1119 = vweird.f32 %v1113
      %vm1120 = vweird.f32 %v1114
      %vm1121 = vmor %vm1119, %vm1120
      %v1122 = vsel %vm1121, %v1114, %v1118
      %v1123 = vand.u32 2147483647, %v1113
      %vm1124 = vcmp.eq.f32.partialorder %v1123, 8.507059e+37
      %v1125 = vand.u32 %v1113, 2147483648
      %v1126 = vor.u32 1.1754944e-38, %v1125
      %v1127 = vsel %vm1124, %v1126, %v1122
      %v1128 = vmul.f32 1.0, %v1127
      %v1129 = vtanh.pop %v1108
      %v1130 = vmul.f32 %v1128, %v1005
      %1132 = vrot.lane.b32.xlu0 %v1129, 64
      %v1133 = vpop.permute.xlu0 %1132
      %v1135 = vmul.f32 %v1128, %v1133
      %1137 = vrot.lane.b32.xlu0 %v1135, 32
      %v1138 = vpop.permute.xlu0 %1137
      %v1140 = vadd.f32 %v1130, %v1138
      %v1141 = vtanh.pop %v1140
      %1143 = vrot.lane.b32.xlu0 %v1141, 64
      %v1144 = vpop.permute.xlu0 %1143
      %v1146 = vmul.f32 %v1128, %v1144
      %p1147 = scmp.gt.s32.totalorder %s173, 5
      %s1148 = scalar_select %p1147, 1, 0
      %v1149 = vstv %s1148
      %vm1150 = vcmp.eq.s32.totalorder %v1149, 1
      %v1151 = vrot.slane %v1002, 7
      %v1153 = vsel %vm1150, %v1075, %v1151
      %v1154 = vsel %vm1150, %v1069, %v1057
      %v1155 = vsel %vm1150, %v1146, %v1004
      %v1156 = vsel %vm1150, %v1140, %v1005
      %v1158 = vrot.slane %v1153, 5
      %1159 = vrot.lane.b32.xlu0 %v1158, 32
      %v1160 = vpop.permute.xlu0 %1159
      %v1161 = vsel %vm156, %v1160, 0
      %1163 = vmatpush.msra.mxu0 0.0
      %1164 = vmatpush.msra.mxu0 0.0
      %1165 = vmatpush.msra.mxu0 0.0
      %1166 = vmatpush.msra.mxu0 0.0
      %1167 = vmatpush.msra.mxu0 0.0
      %1168 = vmatpush.msra.mxu0 0.0
      %1169 = vmatpush.msra.mxu0 0.0
      %1170 = vmatpush.msra.mxu0 0.0
      %1171 = vmatpush.msra.mxu0 0.0
      %1172 = vmatpush.msra.mxu0 0.0
      %1173 = vmatpush.msra.mxu0 0.0
      %1174 = vmatpush.msra.mxu0 0.0
      %1175 = vmatpush.msra.mxu0 %v185
      %1176 = vmatpush.msra.mxu0 %v184
      %1177 = vmatpush.msra.mxu0 %v183
      %1178 = vmatpush.msra.mxu0 %v182
      %1179 = vmatmul.f32.gmra.mxu0 %v1161
      %v1180 = vpop.f32.mrf.mxu0
      %v1181 = vadd.f32 0.0, %v1180
      %1182 = vdwg.mxu0
      %v1184 = vrot.slane %v1181, 2
      %v1186 = vadd.f32 %v266, %v1184
      %v1187 = vxor.u32 %v1186, 2147483648
      %v1188 = vmul.f32 %v1187, 1.442695
      %v1189 = vpow.pop %v1188
      %v1190 = vadd.f32 %v1189, 1.0
      %v1191 = vrcp.pop %v1190
      %v1192 = vmul.f32 %v1190, %v1191
      %v1193 = vsub.f32 1.0, %v1192
      %v1194 = vmul.f32 %v1191, %v1193
      %v1195 = vadd.f32 %v1191, %v1194
      %vm1196 = vweird.f32 %v1190
      %vm1197 = vweird.f32 %v1191
      %vm1198 = vmor %vm1196, %vm1197
      %v1199 = vsel %vm1198, %v1191, %v1195
      %v1200 = vand.u32 2147483647, %v1190
      %vm1201 = vcmp.eq.f32.partialorder %v1200, 8.507059e+37
      %v1202 = vand.u32 %v1190, 2147483648
      %v1203 = vor.u32 1.1754944e-38, %v1202
      %v1204 = vsel %vm1201, %v1203, %v1199
      %v1205 = vmul.f32 1.0, %v1204
      %v1206 = vtanh.pop %v1186
      %v1208 = vrot.slane %v1154, 7
      %v1210 = vmul.f32 %v1205, %v1208
      %1212 = vrot.lane.b32.xlu0 %v1206, 64
      %v1213 = vpop.permute.xlu0 %1212
      %v1215 = vmul.f32 %v1205, %v1213
      %1217 = vrot.lane.b32.xlu0 %v1215, 32
      %v1218 = vpop.permute.xlu0 %1217
      %v1220 = vadd.f32 %v1210, %v1218
      %v1221 = vtanh.pop %v1220
      %1223 = vrot.lane.b32.xlu0 %v1221, 64
      %v1224 = vpop.permute.xlu0 %1223
      %v1226 = vmul.f32 %v1205, %v1224
      %1228 = vrot.lane.b32.xlu0 %v1226, 32
      %v1229 = vpop.permute.xlu0 %1228
      %v1232 = vrot.slane %v1155, 2
      %1233 = vrot.lane.b32.xlu0 %v1232, 64
      %v1234 = vpop.permute.xlu0 %1233
      %v1236 = vsel %vm156, %v1229, %v1234
      %v1238 = vrot.slane %v1236, 6
      %v1239 = vsel %vm334, %v1238, 0
      %1241 = vmatpush.msra.mxu0 0.0
      %1242 = vmatpush.msra.mxu0 0.0
      %1243 = vmatpush.msra.mxu0 0.0
      %1244 = vmatpush.msra.mxu0 0.0
      %1245 = vmatpush.msra.mxu0 0.0
      %1246 = vmatpush.msra.mxu0 0.0
      %1247 = vmatpush.msra.mxu0 0.0
      %1248 = vmatpush.msra.mxu0 0.0
      %1249 = vmatpush.msra.mxu0 %v197
      %1250 = vmatpush.msra.mxu0 %v196
      %1251 = vmatpush.msra.mxu0 %v195
      %1252 = vmatpush.msra.mxu0 %v194
      %1253 = vmatpush.msra.mxu0 %v193
      %1254 = vmatpush.msra.mxu0 %v192
      %1255 = vmatpush.msra.mxu0 %v191
      %1256 = vmatpush.msra.mxu0 %v190
      %1257 = vmatmul.f32.gmra.mxu0 %v1239
      %v1258 = vpop.f32.mrf.mxu0
      %v1259 = vadd.f32 %v199, %v1258
      %1260 = vdwg.mxu0
      %v1261 = vxor.u32 %v1259, 2147483648
      %v1262 = vmul.f32 %v1261, 1.442695
      %v1263 = vpow.pop %v1262
      %v1264 = vadd.f32 %v1263, 1.0
      %v1265 = vrcp.pop %v1264
      %v1266 = vmul.f32 %v1264, %v1265
      %v1267 = vsub.f32 1.0, %v1266
      %v1268 = vmul.f32 %v1265, %v1267
      %v1269 = vadd.f32 %v1265, %v1268
      %vm1270 = vweird.f32 %v1264
      %vm1271 = vweird.f32 %v1265
      %vm1272 = vmor %vm1270, %vm1271
      %v1273 = vsel %vm1272, %v1265, %v1269
      %v1274 = vand.u32 2147483647, %v1264
      %vm1275 = vcmp.eq.f32.partialorder %v1274, 8.507059e+37
      %v1276 = vand.u32 %v1264, 2147483648
      %v1277 = vor.u32 1.1754944e-38, %v1276
      %v1278 = vsel %vm1275, %v1277, %v1273
      %v1279 = vmul.f32 1.0, %v1278
      %v1280 = vtanh.pop %v1259
      %v1281 = vmul.f32 %v1279, %v1156
      %1283 = vrot.lane.b32.xlu0 %v1280, 64
      %v1284 = vpop.permute.xlu0 %1283
      %v1286 = vmul.f32 %v1279, %v1284
      %1288 = vrot.lane.b32.xlu0 %v1286, 32
      %v1289 = vpop.permute.xlu0 %1288
      %v1291 = vadd.f32 %v1281, %v1289
      %v1292 = vtanh.pop %v1291
      %1294 = vrot.lane.b32.xlu0 %v1292, 64
      %v1295 = vpop.permute.xlu0 %1294
      %v1297 = vmul.f32 %v1279, %v1295
      %p1298 = scmp.gt.s32.totalorder %s173, 6
      %s1299 = scalar_select %p1298, 1, 0
      %v1300 = vstv %s1299
      %vm1301 = vcmp.eq.s32.totalorder %v1300, 1
      %v1302 = vrot.slane %v1153, 7
      %v1304 = vsel %vm1301, %v1226, %v1302
      %v1305 = vsel %vm1301, %v1220, %v1208
      %v1306 = vsel %vm1301, %v1297, %v1155
      %v1307 = vsel %vm1301, %v1291, %v1156
      %v1309 = vrot.slane %v1304, 6
      %1310 = vrot.lane.b32.xlu0 %v1309, 32
      %v1311 = vpop.permute.xlu0 %1310
      %v1312 = vsel %vm156, %v1311, 0
      %1314 = vmatpush.msra.mxu0 0.0
      %1315 = vmatpush.msra.mxu0 0.0
      %1316 = vmatpush.msra.mxu0 0.0
      %1317 = vmatpush.msra.mxu0 0.0
      %1318 = vmatpush.msra.mxu0 0.0
      %1319 = vmatpush.msra.mxu0 0.0
      %1320 = vmatpush.msra.mxu0 0.0
      %1321 = vmatpush.msra.mxu0 0.0
      %1322 = vmatpush.msra.mxu0 0.0
      %1323 = vmatpush.msra.mxu0 0.0
      %1324 = vmatpush.msra.mxu0 0.0
      %1325 = vmatpush.msra.mxu0 0.0
      %1326 = vmatpush.msra.mxu0 %v185
      %1327 = vmatpush.msra.mxu0 %v184
      %1328 = vmatpush.msra.mxu0 %v183
      %1329 = vmatpush.msra.mxu0 %v182
      %1330 = vmatmul.f32.gmra.mxu0 %v1312
      %v1331 = vpop.f32.mrf.mxu0
      %v1332 = vadd.f32 0.0, %v1331
      %1333 = vdwg.mxu0
      %v1335 = vrot.slane %v1332, 1
      %v1337 = vadd.f32 %v266, %v1335
      %v1338 = vxor.u32 %v1337, 2147483648
      %v1339 = vmul.f32 %v1338, 1.442695
      %v1340 = vpow.pop %v1339
      %v1341 = vadd.f32 %v1340, 1.0
      %v1342 = vrcp.pop %v1341
      %v1343 = vmul.f32 %v1341, %v1342
      %v1344 = vsub.f32 1.0, %v1343
      %v1345 = vmul.f32 %v1342, %v1344
      %v1346 = vadd.f32 %v1342, %v1345
      %vm1347 = vweird.f32 %v1341
      %vm1348 = vweird.f32 %v1342
      %vm1349 = vmor %vm1347, %vm1348
      %v1350 = vsel %vm1349, %v1342, %v1346
      %v1351 = vand.u32 2147483647, %v1341
      %vm1352 = vcmp.eq.f32.partialorder %v1351, 8.507059e+37
      %v1353 = vand.u32 %v1341, 2147483648
      %v1354 = vor.u32 1.1754944e-38, %v1353
      %v1355 = vsel %vm1352, %v1354, %v1350
      %v1356 = vmul.f32 1.0, %v1355
      %v1357 = vtanh.pop %v1337
      %v1359 = vrot.slane %v1305, 7
      %v1361 = vmul.f32 %v1356, %v1359
      %1363 = vrot.lane.b32.xlu0 %v1357, 64
      %v1364 = vpop.permute.xlu0 %1363
      %v1366 = vmul.f32 %v1356, %v1364
      %1368 = vrot.lane.b32.xlu0 %v1366, 32
      %v1369 = vpop.permute.xlu0 %1368
      %v1371 = vadd.f32 %v1361, %v1369
      %v1372 = vtanh.pop %v1371
      %1374 = vrot.lane.b32.xlu0 %v1372, 64
      %v1375 = vpop.permute.xlu0 %1374
      %v1377 = vmul.f32 %v1356, %v1375
      %1379 = vrot.lane.b32.xlu0 %v1377, 32
      %v1380 = vpop.permute.xlu0 %1379
      %v1383 = vrot.slane %v1306, 1
      %1384 = vrot.lane.b32.xlu0 %v1383, 64
      %v1385 = vpop.permute.xlu0 %1384
      %v1387 = vsel %vm156, %v1380, %v1385
      %v1389 = vrot.slane %v1387, 7
      %v1390 = vsel %vm334, %v1389, 0
      %1392 = vmatpush.msra.mxu0 0.0
      %1393 = vmatpush.msra.mxu0 0.0
      %1394 = vmatpush.msra.mxu0 0.0
      %1395 = vmatpush.msra.mxu0 0.0
      %1396 = vmatpush.msra.mxu0 0.0
      %1397 = vmatpush.msra.mxu0 0.0
      %1398 = vmatpush.msra.mxu0 0.0
      %1399 = vmatpush.msra.mxu0 0.0
      %1400 = vmatpush.msra.mxu0 %v197
      %1401 = vmatpush.msra.mxu0 %v196
      %1402 = vmatpush.msra.mxu0 %v195
      %1403 = vmatpush.msra.mxu0 %v194
      %1404 = vmatpush.msra.mxu0 %v193
      %1405 = vmatpush.msra.mxu0 %v192
      %1406 = vmatpush.msra.mxu0 %v191
      %1407 = vmatpush.msra.mxu0 %v190
      %1408 = vmatmul.f32.gmra.mxu0 %v1390
      %v1409 = vpop.f32.mrf.mxu0
      %v1410 = vadd.f32 %v199, %v1409
      %1411 = vdwg.mxu0
      %v1412 = vxor.u32 %v1410, 2147483648
      %v1413 = vmul.f32 %v1412, 1.442695
      %v1414 = vpow.pop %v1413
      %v1415 = vadd.f32 %v1414, 1.0
      %v1416 = vrcp.pop %v1415
      %v1417 = vmul.f32 %v1415, %v1416
      %v1418 = vsub.f32 1.0, %v1417
      %v1419 = vmul.f32 %v1416, %v1418
      %v1420 = vadd.f32 %v1416, %v1419
      %vm1421 = vweird.f32 %v1415
      %vm1422 = vweird.f32 %v1416
      %vm1423 = vmor %vm1421, %vm1422
      %v1424 = vsel %vm1423, %v1416, %v1420
      %v1425 = vand.u32 2147483647, %v1415
      %vm1426 = vcmp.eq.f32.partialorder %v1425, 8.507059e+37
      %v1427 = vand.u32 %v1415, 2147483648
      %v1428 = vor.u32 1.1754944e-38, %v1427
      %v1429 = vsel %vm1426, %v1428, %v1424
      %v1430 = vmul.f32 1.0, %v1429
      %v1431 = vtanh.pop %v1410
      %v1432 = vmul.f32 %v1430, %v1307
      %1434 = vrot.lane.b32.xlu0 %v1431, 64
      %v1435 = vpop.permute.xlu0 %1434
      %v1437 = vmul.f32 %v1430, %v1435
      %1439 = vrot.lane.b32.xlu0 %v1437, 32
      %v1440 = vpop.permute.xlu0 %1439
      %v1442 = vadd.f32 %v1432, %v1440
      %v1443 = vtanh.pop %v1442
      %1445 = vrot.lane.b32.xlu0 %v1443, 64
      %v1446 = vpop.permute.xlu0 %1445
      %v1448 = vmul.f32 %v1430, %v1446
      %p1449 = scmp.gt.s32.totalorder %s173, 7
      %s1450 = scalar_select %p1449, 1, 0
      %v1451 = vstv %s1450
      %vm1452 = vcmp.eq.s32.totalorder %v1451, 1
      %v1453 = vsel %vm1452, %v1448, %v1306
      %1455 = vrot.lane.b32.xlu0 %v1453, 32
      %v1456 = vpop.permute.xlu0 %1455
      %s1458 = scalar_lea.vmem [#allocation2], %s174
      %1459 = vst.msk [vmem:[%s1458] sm:$0x1] %vm204, %v1456
    $region86: #{_forest_call.1} parent=1 // loop_footer
      %s169 = sadd.s32 %s167, 1
    $region87: #{_forest_call.1} parent=1 // loop_footer_branch
      %166 = sbr.rel target = $region83
    $region88: #{_forest_call.1} parent=1 // loop_exit
      _
    %v1460 = vld [vmem:[%s11] sm:$0x1]
    %v1461 = vmul.f32 %v1460, %v1460
    %vm1462 = vcmask 253952
    %v1463 = vsel %vm1462, %v1461, 0.0
    %1464 = vadd.xlane.f32.xlu0 %v1463
    %v1465 = vpop.xlane.xlu0 %1464
    %v1466 = vrot.slane %v1465, 4
    %v1467 = vadd.f32 %v1465, %v1466
    %v1468 = vrot.slane %v1467, 2
    %v1469 = vadd.f32 %v1467, %v1468
    %v1470 = vrot.slane %v1469, 1
    %v1471 = vadd.f32 %v1469, %v1470
    %s1472 = vtos %v1471
    %s1473 = sld [smem:[#allocation4 + $0x1]]
    %s1474 = scalar_lea.vmem [#allocation2], %s1473
    %v1475 = vld [vmem:[%s1474] sm:$0x1]
    %s1476 = sld [smem:[#allocation4 + $0x2]]
    %s1477 = scalar_lea.vmem [#allocation2], %s1476
    %v1478 = vld [vmem:[%s1477] sm:$0x1]
    %s1479 = sld [smem:[#allocation4 + $0x3]]
    %s1480 = scalar_lea.vmem [#allocation2], %s1479
    %v1481 = vld [vmem:[%s1480] sm:$0x1]
    %v1482 = vmul.f32 %v1475, %v1460
    %v1483 = vsel %vm1462, %v1482, 0.0
    %1484 = vadd.xlane.f32.xlu0 %v1483
    %v1485 = vpop.xlane.xlu0 %1484
    %v1486 = vrot.slane %v1485, 4
    %v1487 = vadd.f32 %v1485, %v1486
    %v1488 = vrot.slane %v1487, 2
    %v1489 = vadd.f32 %v1487, %v1488
    %v1490 = vrot.slane %v1489, 1
    %v1491 = vadd.f32 %v1489, %v1490
    %s1492 = vtos %v1491
    %v1493 = vmul.f32 %v1475, %v1475
    %v1494 = vsel %vm1462, %v1493, 0.0
    %1495 = vadd.xlane.f32.xlu0 %v1494
    %v1496 = vpop.xlane.xlu0 %1495
    %v1497 = vrot.slane %v1496, 4
    %v1498 = vadd.f32 %v1496, %v1497
    %v1499 = vrot.slane %v1498, 2
    %v1500 = vadd.f32 %v1498, %v1499
    %v1501 = vrot.slane %v1500, 1
    %v1502 = vadd.f32 %v1500, %v1501
    %s1503 = vtos %v1502
    %s1504 = smul.f32 %s1503, %s1472
    %v1505 = vstv %s1504
    %v1506 = vrsqrt.pop %v1505
    %v1507 = vmul.f32 %v1506, %v1505
    %v1508 = vmul.f32 %v1507, %v1506
    %v1509 = vmul.f32 0.5, %v1508
    %v1510 = vsub.f32 1.5, %v1509
    %v1511 = vmul.f32 %v1506, %v1510
    %v1512 = vmul.f32 %v1505, %v1511
    %vm1513 = vcmp.eq.f32.partialorder %v1505, inf
    %v1514 = vsel %vm1513, %v1505, %v1512
    %vm1515 = vcmp.eq.f32.partialorder %v1505, 0.0
    %v1516 = vand.u32 %v1505, 2147483648
    %v1517 = vsel %vm1515, %v1516, %v1514
    %s1518 = vtos %v1517
    %s1519 = smax.f32 %s1518, 1e-08
    %v1520 = vstv %s1519
    %v1521 = vrcp.pop %v1520
    %v1522 = vmul.f32 %v1520, %v1521
    %v1523 = vsub.f32 1.0, %v1522
    %v1524 = vmul.f32 %v1521, %v1523
    %v1525 = vadd.f32 %v1521, %v1524
    %vm1526 = vweird.f32 %v1520
    %vm1527 = vweird.f32 %v1521
    %vm1528 = vmor %vm1526, %vm1527
    %v1529 = vsel %vm1528, %v1521, %v1525
    %v1530 = vand.u32 2147483647, %v1520
    %vm1531 = vcmp.eq.f32.partialorder %v1530, 8.507059e+37
    %v1532 = vand.u32 %v1520, 2147483648
    %v1533 = vor.u32 1.1754944e-38, %v1532
    %v1534 = vsel %vm1531, %v1533, %v1529
    %s1535 = vtos %v1534
    %s1536 = smul.f32 %s1492, %s1535
    %v1537 = vmul.f32 %v1478, %v1460
    %v1538 = vsel %vm1462, %v1537, 0.0
    %1539 = vadd.xlane.f32.xlu0 %v1538
    %v1540 = vpop.xlane.xlu0 %1539
    %v1541 = vrot.slane %v1540, 4
    %v1542 = vadd.f32 %v1540, %v1541
    %v1543 = vrot.slane %v1542, 2
    %v1544 = vadd.f32 %v1542, %v1543
    %v1545 = vrot.slane %v1544, 1
    %v1546 = vadd.f32 %v1544, %v1545
    %s1547 = vtos %v1546
    %v1548 = vmul.f32 %v1478, %v1478
    %v1549 = vsel %vm1462, %v1548, 0.0
    %1550 = vadd.xlane.f32.xlu0 %v1549
    %v1551 = vpop.xlane.xlu0 %1550
    %v1552 = vrot.slane %v1551, 4
    %v1553 = vadd.f32 %v1551, %v1552
    %v1554 = vrot.slane %v1553, 2
    %v1555 = vadd.f32 %v1553, %v1554
    %v1556 = vrot.slane %v1555, 1
    %v1557 = vadd.f32 %v1555, %v1556
    %s1558 = vtos %v1557
    %s1559 = smul.f32 %s1558, %s1472
    %v1560 = vstv %s1559
    %v1561 = vrsqrt.pop %v1560
    %v1562 = vmul.f32 %v1561, %v1560
    %v1563 = vmul.f32 %v1562, %v1561
    %v1564 = vmul.f32 0.5, %v1563
    %v1565 = vsub.f32 1.5, %v1564
    %v1566 = vmul.f32 %v1561, %v1565
    %v1567 = vmul.f32 %v1560, %v1566
    %vm1568 = vcmp.eq.f32.partialorder %v1560, inf
    %v1569 = vsel %vm1568, %v1560, %v1567
    %vm1570 = vcmp.eq.f32.partialorder %v1560, 0.0
    %v1571 = vand.u32 %v1560, 2147483648
    %v1572 = vsel %vm1570, %v1571, %v1569
    %s1573 = vtos %v1572
    %s1574 = smax.f32 %s1573, 1e-08
    %v1575 = vstv %s1574
    %v1576 = vrcp.pop %v1575
    %v1577 = vmul.f32 %v1575, %v1576
    %v1578 = vsub.f32 1.0, %v1577
    %v1579 = vmul.f32 %v1576, %v1578
    %v1580 = vadd.f32 %v1576, %v1579
    %vm1581 = vweird.f32 %v1575
    %vm1582 = vweird.f32 %v1576
    %vm1583 = vmor %vm1581, %vm1582
    %v1584 = vsel %vm1583, %v1576, %v1580
    %v1585 = vand.u32 2147483647, %v1575
    %vm1586 = vcmp.eq.f32.partialorder %v1585, 8.507059e+37
    %v1587 = vand.u32 %v1575, 2147483648
    %v1588 = vor.u32 1.1754944e-38, %v1587
    %v1589 = vsel %vm1586, %v1588, %v1584
    %s1590 = vtos %v1589
    %s1591 = smul.f32 %s1547, %s1590
    %v1592 = vmul.f32 %v1481, %v1460
    %v1593 = vsel %vm1462, %v1592, 0.0
    %1594 = vadd.xlane.f32.xlu0 %v1593
    %v1595 = vpop.xlane.xlu0 %1594
    %v1596 = vrot.slane %v1595, 4
    %v1597 = vadd.f32 %v1595, %v1596
    %v1598 = vrot.slane %v1597, 2
    %v1599 = vadd.f32 %v1597, %v1598
    %v1600 = vrot.slane %v1599, 1
    %v1601 = vadd.f32 %v1599, %v1600
    %s1602 = vtos %v1601
    %v1603 = vmul.f32 %v1481, %v1481
    %v1604 = vsel %vm1462, %v1603, 0.0
    %1605 = vadd.xlane.f32.xlu0 %v1604
    %v1606 = vpop.xlane.xlu0 %1605
    %v1607 = vrot.slane %v1606, 4
    %v1608 = vadd.f32 %v1606, %v1607
    %v1609 = vrot.slane %v1608, 2
    %v1610 = vadd.f32 %v1608, %v1609
    %v1611 = vrot.slane %v1610, 1
    %v1612 = vadd.f32 %v1610, %v1611
    %s1613 = vtos %v1612
    %s1614 = smul.f32 %s1613, %s1472
    %v1615 = vstv %s1614
    %v1616 = vrsqrt.pop %v1615
    %v1617 = vmul.f32 %v1616, %v1615
    %v1618 = vmul.f32 %v1617, %v1616
    %v1619 = vmul.f32 0.5, %v1618
    %v1620 = vsub.f32 1.5, %v1619
    %v1621 = vmul.f32 %v1616, %v1620
    %v1622 = vmul.f32 %v1615, %v1621
    %vm1623 = vcmp.eq.f32.partialorder %v1615, inf
    %v1624 = vsel %vm1623, %v1615, %v1622
    %vm1625 = vcmp.eq.f32.partialorder %v1615, 0.0
    %v1626 = vand.u32 %v1615, 2147483648
    %v1627 = vsel %vm1625, %v1626, %v1624
    %s1628 = vtos %v1627
    %s1629 = smax.f32 %s1628, 1e-08
    %v1630 = vstv %s1629
    %v1631 = vrcp.pop %v1630
    %v1632 = vmul.f32 %v1630, %v1631
    %v1633 = vsub.f32 1.0, %v1632
    %v1634 = vmul.f32 %v1631, %v1633
    %v1635 = vadd.f32 %v1631, %v1634
    %vm1636 = vweird.f32 %v1630
    %vm1637 = vweird.f32 %v1631
    %vm1638 = vmor %vm1636, %vm1637
    %v1639 = vsel %vm1638, %v1631, %v1635
    %v1640 = vand.u32 2147483647, %v1630
    %vm1641 = vcmp.eq.f32.partialorder %v1640, 8.507059e+37
    %v1642 = vand.u32 %v1630, 2147483648
    %v1643 = vor.u32 1.1754944e-38, %v1642
    %v1644 = vsel %vm1641, %v1643, %v1639
    %s1645 = vtos %v1644
    %s1646 = smul.f32 %s1602, %s1645
    %s1647 = smax.f32 %s1536, %s1591
    %s1648 = smax.f32 %s1647, %s1646
    %s1649 = ssub.f32 %s1536, %s1648
    %v1650 = vstv %s1649
    %v1651 = vmul.f32 %v1650, 1.442695
    %v1652 = vpow.pop %v1651
    %s1653 = vtos %v1652
    %s1654 = ssub.f32 %s1591, %s1648
    %v1655 = vstv %s1654
    %v1656 = vmul.f32 %v1655, 1.442695
    %v1657 = vpow.pop %v1656
    %s1658 = vtos %v1657
    %s1659 = ssub.f32 %s1646, %s1648
    %v1660 = vstv %s1659
    %v1661 = vmul.f32 %v1660, 1.442695
    %v1662 = vpow.pop %v1661
    %s1663 = vtos %v1662
    %s1664 = sadd.f32 %s1653, %s1658
    %s1665 = sadd.f32 %s1664, %s1663
    %v1666 = vstv %s1665
    %v1667 = vrcp.pop %v1666
    %v1668 = vmul.f32 %v1666, %v1667
    %v1669 = vsub.f32 1.0, %v1668
    %v1670 = vmul.f32 %v1667, %v1669
    %v1671 = vadd.f32 %v1667, %v1670
    %vm1672 = vweird.f32 %v1666
    %vm1673 = vweird.f32 %v1667
    %vm1674 = vmor %vm1672, %vm1673
    %v1675 = vsel %vm1674, %v1667, %v1671
    %v1676 = vand.u32 2147483647, %v1666
    %vm1677 = vcmp.eq.f32.partialorder %v1676, 8.507059e+37
    %v1678 = vand.u32 %v1666, 2147483648
    %v1679 = vor.u32 1.1754944e-38, %v1678
    %v1680 = vsel %vm1677, %v1679, %v1675
    %s1681 = vtos %v1680
    %v1682 = vstv %s1653
    %v1683 = vmul.f32 %v1682, %v1475
    %v1684 = vstv %s1658
    %v1685 = vmul.f32 %v1684, %v1478
    %v1686 = vadd.f32 %v1683, %v1685
    %v1687 = vstv %s1663
    %v1688 = vmul.f32 %v1687, %v1481
    %v1689 = vadd.f32 %v1686, %v1688
    %v1690 = vstv %s1681
    %v1691 = vmul.f32 %v1689, %v1690
    %1692 = vst.msk [vmem:[#allocation18] sm:$0x1] %vm1462, %v1691
    %1693 = vst.msk [vmem:[#allocation18 + $0x1] sm:$0x1] %vm1462, %v1475
    %1694 = vst.msk [vmem:[#allocation18 + $0x2] sm:$0x1] %vm1462, %v1478
    %1695 = vst.msk [vmem:[#allocation18 + $0x3] sm:$0x1] %vm1462, %v1481
    // Predicated region
    $region89: #{_forest_call.1} parent=1 // pred_check
      _
    $region90: #{_forest_call.1} parent=1 // pred_check_branch
      %1697 = sbr.rel (0) target = $region92
    $region91: #{_forest_call.1} parent=1 // pred_region
      %1699 = vsyncadd [#allocation6], 0
      %s1701 = sshll.u32 [#allocation18], 4
      %s1702 = int_to_ptr.vmem [resolvable:$true] %s1701
      %s1703 = sshll.u32 %s12, 4
      %s1704 = int_to_ptr.hbm [resolvable:$true] %s1703
      %1706 = dma.vmem_to_hbm [thread:$0]  %s1702, 64, %s1704, [#allocation6]
    $region92: #{_forest_call.1} parent=1 // pred_fallthru
      _
    // Predicated region
    $region93: #{_forest_call.1} parent=1 // pred_check
      _
    $region94: #{_forest_call.1} parent=1 // pred_check_branch
      %1708 = sbr.rel (0) target = $region96
    $region95: #{_forest_call.1} parent=1 // pred_region
      %1710 = dma.done [#allocation6], 64
    $region96: #{_forest_call.1} parent=1 // pred_fallthru
      _
    %1711 = vsyncpa [#allocation5], 1
    %1712 = vsyncpa [#allocation16], 1
    %1713 = vsyncpa [#allocation6], 1
    %1714 = vsyncpa [#allocation7], 1
    %1715 = vsyncpa [#allocation9], 1
    %1716 = vsyncpa [#allocation12], 1

</llo_original>
